<compile_context>
chip_gen: v7x
topology: tpu7x:2x2x1
jax: 0.10.0
libtpu: 0.0.40
codegen_flags: <defaults>
</compile_context>

<pallas_src>
import functools

import jax
import jax.numpy as jnp
from jax.experimental import pallas as pl
from jax.experimental.pallas import tpu as pltpu


def _pick_vmem_limit():
    # Generation-aware VMEM budget: ~3/4 of physical (v5e/v6e 128 MiB -> 96 MiB,
    # v7x 64 MiB -> 48 MiB), conservative fallback if the query is unavailable.
    try:
        cap = int(pltpu.get_tpu_info().vmem_capacity_bytes)
    except Exception:  # pragma: no cover - defensive
        cap = 64 * 1024 * 1024
    return int(min(cap * 3 // 4, 100 * 1024 * 1024))


_VMEM_LIMIT = _pick_vmem_limit()


def _largest_divisor(total, cap):
    """Largest divisor of `total` that is <= cap (static Python ints)."""
    t = min(total, cap)
    while total % t:
        t -= 1
    return t


# --------------------------- tiled linear projection --------------------------

def _linear_kernel(x_ref, w_ref, b_ref, o_ref, acc_ref):
    # o = x @ W + b with a K-reduction grid axis; f32 accumulator scratch,
    # bf16 MXU operands, bias added once at the final K step.
    @pl.when(pl.program_id(2) == 0)
    def _init():
        acc_ref[...] = jnp.zeros(acc_ref.shape, acc_ref.dtype)

    acc_ref[...] += jnp.dot(
        x_ref[...].astype(jnp.bfloat16),
        w_ref[...].astype(jnp.bfloat16),
        preferred_element_type=jnp.float32,
    )

    @pl.when(pl.program_id(2) == pl.num_programs(2) - 1)
    def _fin():
        o_ref[...] = (acc_ref[...] + b_ref[...]).astype(o_ref.dtype)


def linear_pallas(x2d, wt, b2d, *, out_dtype=jnp.float32,
                  tile_m=256, tile_n=256, tile_k=512):
    """x2d: (M, K); wt: (K, OUT) pre-transposed (bf16); b2d: (1, OUT) f32."""
    M, K = x2d.shape
    OUT = wt.shape[1]
    tm = min(M, tile_m)
    tn = min(OUT, tile_n)
    tk = _largest_divisor(K, tile_k)   # K must divide exactly (reduction axis)
    return pl.pallas_call(
        _linear_kernel,
        grid=(pl.cdiv(M, tm), pl.cdiv(OUT, tn), K // tk),
        in_specs=[
            pl.BlockSpec((tm, tk), lambda i, j, k: (i, k)),
            pl.BlockSpec((tk, tn), lambda i, j, k: (k, j)),
            pl.BlockSpec((1, tn), lambda i, j, k: (0, j)),
        ],
        out_specs=pl.BlockSpec((tm, tn), lambda i, j, k: (i, j)),
        out_shape=jax.ShapeDtypeStruct((M, OUT), out_dtype),
        scratch_shapes=[pltpu.VMEM((tm, tn), jnp.float32)],
        compiler_params=pltpu.CompilerParams(
            dimension_semantics=("parallel", "parallel", "arbitrary"),
            vmem_limit_bytes=_VMEM_LIMIT,
        ),
    )(x2d, wt, b2d)


# ------------------ attention kernel A: exact softmax + weights ---------------

def _attn_exact_kernel(q_ref, k_ref, v_ref, o_ref, w_ref, *, num_heads):
    # q_ref: (tl, N, E) bf16; k_ref/v_ref: (S, N, E) bf16.
    # o_ref: (tl, N, E) bf16  (heads merged in-kernel -> lane-dense E stores)
    # w_ref: (N, tl, S) f32   (head-AVERAGED attention probabilities)
    tl, N, E = q_ref.shape
    S = k_ref.shape[0]
    H = num_heads
    hd = E // H
    q = q_ref[...]
    k = k_ref[...]
    v = v_ref[...]
    inv_h = 1.0 / float(H)
    for n in range(N):                       # static unroll over batch
        w_sum = jnp.zeros((tl, S), jnp.float32)
        outs = []
        for h in range(H):                   # static unroll over heads
            sl = slice(h * hd, (h + 1) * hd)
            s = jnp.einsum("qd,kd->qk", q[:, n, sl], k[:, n, sl],
                           preferred_element_type=jnp.float32)     # (tl, S)
            m = jnp.max(s, axis=-1, keepdims=True)
            e = jnp.exp(s - m)
            denom = jnp.sum(e, axis=-1, keepdims=True)
            inv = pl.reciprocal(denom, approx=True)
            inv = inv * (2.0 - denom * inv)  # Newton refine -> ~f32 accuracy
            p = e * inv                      # (tl, S) softmax probabilities
            w_sum = w_sum + p
            outs.append(jnp.dot(p.astype(v.dtype), v[:, n, sl],
                                preferred_element_type=jnp.float32))
        # Merge heads in-kernel: store the full E-wide (lane-dense) slab.
        o_ref[:, n, :] = jnp.concatenate(outs, axis=-1).astype(o_ref.dtype)
        w_ref[n] = w_sum * inv_h


def attention_exact_pallas(q, k, v, num_heads, *, tile_l=128):
    """q: (L, N, E) bf16; k/v: (S, N, E) bf16 ->
       (attn (L, N, E) bf16, head-averaged weights (N, L, S) f32)."""
    L, N, E = q.shape
    S = k.shape[0]
    tl = L if L <= tile_l else _largest_divisor(L, tile_l)
    kernel = functools.partial(_attn_exact_kernel, num_heads=num_heads)
    return pl.pallas_call(
        kernel,
        grid=(L // tl,),
        in_specs=[
            pl.BlockSpec((tl, N, E), lambda i: (i, 0, 0)),
            pl.BlockSpec((S, N, E), lambda i: (0, 0, 0)),   # resident across L
            pl.BlockSpec((S, N, E), lambda i: (0, 0, 0)),
        ],
        out_specs=[
            pl.BlockSpec((tl, N, E), lambda i: (i, 0, 0)),
            pl.BlockSpec((N, tl, S), lambda i: (0, i, 0)),
        ],
        out_shape=[
            jax.ShapeDtypeStruct((L, N, E), jnp.bfloat16),
            jax.ShapeDtypeStruct((N, L, S), jnp.float32),
        ],
        compiler_params=pltpu.CompilerParams(
            dimension_semantics=("parallel",),
            vmem_limit_bytes=_VMEM_LIMIT,
        ),
    )(q, k, v)


# -------- attention kernel B: flash-style S-tiled online softmax (no weights) ---

def _attn_flash_kernel(q_ref, k_ref, v_ref, o_ref, m_scr, l_scr, acc_scr, *,
                       num_heads):
    # q_ref: (tl, N, E) bf16; k_ref/v_ref: (ts, N, E) bf16; o_ref: (tl, N, E) bf16
    # Scratch persists across the S ("arbitrary") grid axis:
    #   m_scr/l_scr: (N*H, tl, 1) f32, acc_scr: (N*H, tl, hd) f32.
    tl, N, E = q_ref.shape
    H = num_heads
    hd = E // H
    si = pl.program_id(1)

    @pl.when(si == 0)
    def _init():
        m_scr[...] = jnp.full(m_scr.shape, -jnp.inf, m_scr.dtype)
        l_scr[...] = jnp.zeros(l_scr.shape, l_scr.dtype)
        acc_scr[...] = jnp.zeros(acc_scr.shape, acc_scr.dtype)

    q = q_ref[...]
    k = k_ref[...]
    v = v_ref[...]
    for n in range(N):                       # static unroll over batch
        for h in range(H):                   # static unroll over heads
            b = n * H + h
            sl = slice(h * hd, (h + 1) * hd)
            s = jnp.einsum("qd,kd->qk", q[:, n, sl], k[:, n, sl],
                           preferred_element_type=jnp.float32)     # (tl, ts)
            m_prev = m_scr[b]                                       # (tl, 1)
            m_new = jnp.maximum(m_prev, jnp.max(s, axis=-1, keepdims=True))
            alpha = jnp.exp(m_prev - m_new)
            p = jnp.exp(s - m_new)
            l_scr[b] = alpha * l_scr[b] + jnp.sum(p, axis=-1, keepdims=True)
            acc_scr[b] = alpha * acc_scr[b] + jnp.dot(
                p.astype(v.dtype), v[:, n, sl],
                preferred_element_type=jnp.float32)
            m_scr[b] = m_new

    @pl.when(si == pl.num_programs(1) - 1)
    def _fin():
        # Deferred normalization: one reciprocal per row, applied once.
        for n in range(N):
            outs = []
            for h in range(H):
                b = n * H + h
                l = l_scr[b]
                inv = pl.reciprocal(l, approx=True)
                inv = inv * (2.0 - l * inv)
                outs.append(acc_scr[b] * inv)
            o_ref[:, n, :] = jnp.concatenate(outs, axis=-1).astype(o_ref.dtype)


def attention_flash_pallas(q, k, v, num_heads, *, tile_l=128, tile_s=512):
    """Flash-style attention (no weights output). q: (L, N, E); k/v: (S, N, E)."""
    L, N, E = q.shape
    S = k.shape[0]
    hd = E // num_heads
    tl = L if L <= tile_l else _largest_divisor(L, tile_l)
    ts = _largest_divisor(S, tile_s)         # S tile must divide (reduction axis)
    kernel = functools.partial(_attn_flash_kernel, num_heads=num_heads)
    return pl.pallas_call(
        kernel,
        grid=(L // tl, S // ts),
        in_specs=[
            pl.BlockSpec((tl, N, E), lambda i, j: (i, 0, 0)),
            pl.BlockSpec((ts, N, E), lambda i, j: (j, 0, 0)),
            pl.BlockSpec((ts, N, E), lambda i, j: (j, 0, 0)),
        ],
        out_specs=pl.BlockSpec((tl, N, E), lambda i, j: (i, 0, 0)),
        out_shape=jax.ShapeDtypeStruct((L, N, E), jnp.bfloat16),
        scratch_shapes=[
            pltpu.VMEM((N * num_heads, tl, 1), jnp.float32),
            pltpu.VMEM((N * num_heads, tl, 1), jnp.float32),
            pltpu.VMEM((N * num_heads, tl, hd), jnp.float32),
        ],
        compiler_params=pltpu.CompilerParams(
            dimension_semantics=("parallel", "arbitrary"),
            vmem_limit_bytes=_VMEM_LIMIT,
        ),
    )(q, k, v)


# ------------------------------ parameter prep -------------------------------

def prepare_params(params, num_heads):
    """One-time conversion of PyTorch-layout parameters into kernel-ready form:
    weights pre-transposed to (in, out), cast to bf16 for the MXU, and the
    head_dim**-0.5 scaling folded into the Q projection. Biases stay f32."""
    E = params["q_w"].shape[0]
    head_dim = E // num_heads
    scaling = float(head_dim) ** (-0.5)
    return {
        "wq": (params["q_w"].T * scaling).astype(jnp.bfloat16),
        "wk": params["k_w"].T.astype(jnp.bfloat16),
        "wv": params["v_w"].T.astype(jnp.bfloat16),
        "wo": params["o_w"].T.astype(jnp.bfloat16),
        "bq": (params["q_b"] * scaling)[None, :].astype(jnp.float32),
        "bk": params["k_b"][None, :].astype(jnp.float32),
        "bv": params["v_b"][None, :].astype(jnp.float32),
        "bo": params["o_b"][None, :].astype(jnp.float32),
    }


# ----------------------------- forward (module) -------------------------------

def dp_multihead_attention_forward(query, key, value, prepared, num_heads,
                                   need_weights=True, key_padding_mask=None,
                                   attn_mask=None, flash_tiles=(128, 512)):
    """DPMultiheadAttention.forward (default config). `prepared` from prepare_params()."""
    # TODO(synk): masks / add_bias_kv / add_zero_attn / dropout>0 not implemented.
    if key_padding_mask is not None or attn_mask is not None:
        raise NotImplementedError("attn_mask / key_padding_mask are not supported")

    tgt_len, bsz, embed_dim = query.shape
    src_len = key.shape[0]
    assert embed_dim % num_heads == 0

    # Input projections: tiled bf16 matmuls, f32 accumulation, bf16 activations.
    q_p = linear_pallas(query.reshape(tgt_len * bsz, embed_dim),
                        prepared["wq"], prepared["bq"], out_dtype=jnp.bfloat16)
    k_p = linear_pallas(key.reshape(src_len * bsz, key.shape[-1]),
                        prepared["wk"], prepared["bk"], out_dtype=jnp.bfloat16)
    v_p = linear_pallas(value.reshape(src_len * bsz, value.shape[-1]),
                        prepared["wv"], prepared["bv"], out_dtype=jnp.bfloat16)

    # Free (view) reshapes back to the natural (len, N, E) layout; the head
    # split / merge happens inside the attention kernels (no XLA transposes).
    q3 = q_p.reshape(tgt_len, bsz, embed_dim)
    k3 = k_p.reshape(src_len, bsz, embed_dim)
    v3 = v_p.reshape(src_len, bsz, embed_dim)

    if need_weights:
        attn, attn_w = attention_exact_pallas(q3, k3, v3, num_heads)
    else:
        tl, ts = flash_tiles
        attn = attention_flash_pallas(q3, k3, v3, num_heads, tile_l=tl, tile_s=ts)
        attn_w = None
    # dropout(p=0.0) is the identity.

    out = linear_pallas(attn.reshape(tgt_len * bsz, embed_dim),
                        prepared["wo"], prepared["bo"],
                        out_dtype=jnp.float32).reshape(tgt_len, bsz, embed_dim)
    return out, attn_w


# ------------------------- pure-JAX reference (check) -------------------------

def reference_forward(query, key, value, params, num_heads):
    tgt_len, bsz, embed_dim = query.shape
    head_dim = embed_dim // num_heads
    scaling = float(head_dim) ** (-0.5)
    q = query @ params["q_w"].T + params["q_b"]
    k = key @ params["k_w"].T + params["k_b"]
    v = value @ params["v_w"].T + params["v_b"]
    q = q * scaling
    q = q.reshape(tgt_len, bsz * num_heads, head_dim).transpose(1, 0, 2)
    k = k.reshape(-1, bsz * num_heads, head_dim).transpose(1, 0, 2)
    v = v.reshape(-1, bsz * num_heads, head_dim).transpose(1, 0, 2)
    s = jnp.einsum("blh,bsh->bls", q, k)
    p = jax.nn.softmax(s, axis=-1)
    o = jnp.einsum("bls,bsh->blh", p, v)
    o = o.transpose(1, 0, 2).reshape(tgt_len, bsz, embed_dim)
    o = o @ params["o_w"].T + params["o_b"]
    w = p.reshape(bsz, num_heads, tgt_len, -1).sum(axis=1) / num_heads
    return o, w


# ------------------------------------ main ------------------------------------

if __name__ == "__main__":
    # Small shapes: seq=8, batch=2, embed_dim=32, num_heads=4 (head_dim=8)
    L, N, E, H = 8, 2, 32, 4

    key0 = jax.random.PRNGKey(0)
    keys = jax.random.split(key0, 12)

    # Deterministic synthetic parameters (nn.Linear layout: weight (out, in), bias (out,))
    params = {
        "q_w": 0.1 * jax.random.normal(keys[0], (E, E), jnp.float32),
        "q_b": 0.1 * jax.random.normal(keys[1], (E,), jnp.float32),
        "k_w": 0.1 * jax.random.normal(keys[2], (E, E), jnp.float32),
        "k_b": 0.1 * jax.random.normal(keys[3], (E,), jnp.float32),
        "v_w": 0.1 * jax.random.normal(keys[4], (E, E), jnp.float32),
        "v_b": 0.1 * jax.random.normal(keys[5], (E,), jnp.float32),
        "o_w": 0.1 * jax.random.normal(keys[6], (E, E), jnp.float32),
        "o_b": 0.1 * jax.random.normal(keys[7], (E,), jnp.float32),
    }

    query = jax.random.normal(keys[8], (L, N, E), jnp.float32)
    key_in = jax.random.normal(keys[9], (L, N, E), jnp.float32)
    value = jax.random.normal(keys[10], (L, N, E), jnp.float32)

    prepared = prepare_params(params, H)       # one-time transpose / bf16 / scaling
    ref_out, ref_w = reference_forward(query, key_in, value, params, H)

    # Path 1: need_weights=True (exact softmax kernel, head-averaged weights).
    fwd = jax.jit(functools.partial(dp_multihead_attention_forward,
                                    num_heads=H, need_weights=True))
    out, attn_w = fwd(query, key_in, value, prepared)
    out = jax.block_until_ready(out)
    attn_w = jax.block_until_ready(attn_w)

    assert out.shape == (L, N, E) and out.dtype == jnp.float32
    assert attn_w.shape == (N, L, L)
    # bf16 MXU operands + approx-reciprocal softmax -> relaxed tolerance.
    assert jnp.allclose(out, ref_out, atol=3e-2, rtol=3e-2)
    assert jnp.allclose(attn_w, ref_w, atol=2e-2, rtol=2e-2)

    # Path 2: need_weights=False (flash-style online-softmax kernel); small
    # tiles so the L-parallel / S-arbitrary multi-tile path is exercised.
    fwd_fast = jax.jit(functools.partial(dp_multihead_attention_forward,
                                         num_heads=H, need_weights=False,
                                         flash_tiles=(4, 4)))
    out_fast, w_none = fwd_fast(query, key_in, value, prepared)
    out_fast = jax.block_until_ready(out_fast)
    assert w_none is None
    assert out_fast.shape == (L, N, E)
    assert jnp.allclose(out_fast, ref_out, atol=3e-2, rtol=3e-2)

    print("KERNEL_OK")
</pallas_src>

<mosaic_0001>
module attributes {stable_mosaic.version = 11 : i64} {
  func.func @_linear_kernel(%arg0: i32, %arg1: i32, %arg2: i32, %arg3: memref<16x32xf32, #tpu.memory_space<vmem>>, %arg4: memref<32x32xbf16, #tpu.memory_space<vmem>>, %arg5: memref<1x32xf32, #tpu.memory_space<vmem>>, %arg6: memref<16x32xbf16, #tpu.memory_space<vmem>>, %arg7: memref<16x32xf32, #tpu.memory_space<vmem>>) attributes {dimension_semantics = [#tpu.dimension_semantics<parallel>, #tpu.dimension_semantics<parallel>, #tpu.dimension_semantics<arbitrary>], iteration_bounds = array<i64: 1, 1, 1>, scalar_prefetch = 0 : i64, scratch_operands = 1 : i64, tpu.core_type = #tpu.core_type<tc>, window_params = [{transform_indices = @transform_0, window_bounds = array<i64: 16, 32>}, {transform_indices = @transform_1, window_bounds = array<i64: 32, 32>}, {transform_indices = @transform_2, window_bounds = array<i64: 1, 32>}, {transform_indices = @transform_3, window_bounds = array<i64: 16, 32>}]} {
    %c0_i32 = arith.constant 0 : i32
    %0 = arith.cmpi eq, %arg2, %c0_i32 : i32
    %1 = arith.extui %0 : i1 to i32
    %c0_i32_0 = arith.constant 0 : i32
    %2 = arith.cmpi ne, %1, %c0_i32_0 : i32
    scf.if %2 {
      %cst_10 = arith.constant 0.000000e+00 : f32
      %13 = vector.broadcast %cst_10 : f32 to vector<16x32xf32>
      %c0_11 = arith.constant 0 : index
      %c0_12 = arith.constant 0 : index
      %14 = vector.load %arg7[%c0_11, %c0_12] : memref<16x32xf32, #tpu.memory_space<vmem>>, vector<16x32xf32>
      tpu.vector_store %arg7[%c0_11, %c0_12], %13 {strides = array<i32>} : memref<16x32xf32, #tpu.memory_space<vmem>>, vector<16x32xf32>,
    } else {
    }
    %c0 = arith.constant 0 : index
    %c0_1 = arith.constant 0 : index
    %3 = vector.load %arg7[%c0, %c0_1] : memref<16x32xf32, #tpu.memory_space<vmem>>, vector<16x32xf32>
    %c0_2 = arith.constant 0 : index
    %c0_3 = arith.constant 0 : index
    %4 = vector.load %arg3[%c0_2, %c0_3] : memref<16x32xf32, #tpu.memory_space<vmem>>, vector<16x32xf32>
    %5 = arith.truncf %4 : vector<16x32xf32> to vector<16x32xbf16>
    %c0_4 = arith.constant 0 : index
    %c0_5 = arith.constant 0 : index
    %6 = vector.load %arg4[%c0_4, %c0_5] : memref<32x32xbf16, #tpu.memory_space<vmem>>, vector<32x32xbf16>
    %cst = arith.constant dense<0.000000e+00> : vector<16x32xf32>
    %7 = tpu.matmul %5, %6, %cst {dimension_numbers = #tpu.dot_dimension_numbers<[1], [0], [0], [1], [0, 0, 1, 1], [], []>} : vector<16x32xbf16>, vector<32x32xbf16>, vector<16x32xf32> -> vector<16x32xf32>
    %8 = arith.addf %3, %7 : vector<16x32xf32>
    %c0_6 = arith.constant 0 : index
    %c0_7 = arith.constant 0 : index
    %9 = vector.load %arg7[%c0_6, %c0_7] : memref<16x32xf32, #tpu.memory_space<vmem>>, vector<16x32xf32>
    tpu.vector_store %arg7[%c0_6, %c0_7], %8 {strides = array<i32>} : memref<16x32xf32, #tpu.memory_space<vmem>>, vector<16x32xf32>,
    %c0_i32_8 = arith.constant 0 : i32
    %10 = arith.cmpi eq, %arg2, %c0_i32_8 : i32
    %11 = arith.extui %10 : i1 to i32
    %c0_i32_9 = arith.constant 0 : i32
    %12 = arith.cmpi ne, %11, %c0_i32_9 : i32
    scf.if %12 {
      %c0_10 = arith.constant 0 : index
      %c0_11 = arith.constant 0 : index
      %13 = vector.load %arg7[%c0_10, %c0_11] : memref<16x32xf32, #tpu.memory_space<vmem>>, vector<16x32xf32>
      %c0_12 = arith.constant 0 : index
      %c0_13 = arith.constant 0 : index
      %14 = vector.load %arg5[%c0_12, %c0_13] : memref<1x32xf32, #tpu.memory_space<vmem>>, vector<1x32xf32>
      %15 = vector.broadcast %14 : vector<1x32xf32> to vector<16x32xf32>
      %16 = arith.addf %13, %15 : vector<16x32xf32>
      %17 = arith.truncf %16 : vector<16x32xf32> to vector<16x32xbf16>
      %c0_14 = arith.constant 0 : index
      %c0_15 = arith.constant 0 : index
      %18 = vector.load %arg6[%c0_14, %c0_15] : memref<16x32xbf16, #tpu.memory_space<vmem>>, vector<16x32xbf16>
      tpu.vector_store %arg6[%c0_14, %c0_15], %17 {strides = array<i32>} : memref<16x32xbf16, #tpu.memory_space<vmem>>, vector<16x32xbf16>,
    } else {
    }
    return
  }
  func.func @transform_0(%arg0: i32, %arg1: i32, %arg2: i32) -> (i32, i32) {
    %c0_i32 = arith.constant 0 : i32
    return %arg0, %arg2 : i32, i32
  }
  func.func @transform_1(%arg0: i32, %arg1: i32, %arg2: i32) -> (i32, i32) {
    %c0_i32 = arith.constant 0 : i32
    return %arg2, %arg1 : i32, i32
  }
  func.func @transform_2(%arg0: i32, %arg1: i32, %arg2: i32) -> (i32, i32) {
    %c0_i32 = arith.constant 0 : i32
    %c0_i32_0 = arith.constant 0 : i32
    return %c0_i32, %arg1 : i32, i32
  }
  func.func @transform_3(%arg0: i32, %arg1: i32, %arg2: i32) -> (i32, i32) {
    %c0_i32 = arith.constant 0 : i32
    return %arg0, %arg1 : i32, i32
  }
}

module attributes {stable_mosaic.version = 11 : i64} {
  func.func @_linear_kernel(%arg0: i32, %arg1: i32, %arg2: i32, %arg3: memref<16x32xf32, #tpu.memory_space<vmem>>, %arg4: memref<32x32xbf16, #tpu.memory_space<vmem>>, %arg5: memref<1x32xf32, #tpu.memory_space<vmem>>, %arg6: memref<16x32xbf16, #tpu.memory_space<vmem>>, %arg7: memref<16x32xf32, #tpu.memory_space<vmem>>) attributes {dimension_semantics = [#tpu.dimension_semantics<parallel>, #tpu.dimension_semantics<parallel>, #tpu.dimension_semantics<arbitrary>], iteration_bounds = array<i64: 1, 1, 1>, scalar_prefetch = 0 : i64, scratch_operands = 1 : i64, tpu.core_type = #tpu.core_type<tc>, window_params = [{transform_indices = @transform_0, window_bounds = array<i64: 16, 32>}, {transform_indices = @transform_1, window_bounds = array<i64: 32, 32>}, {transform_indices = @transform_2, window_bounds = array<i64: 1, 32>}, {transform_indices = @transform_3, window_bounds = array<i64: 16, 32>}]} {
    %c0_i32 = arith.constant 0 : i32
    %0 = arith.cmpi eq, %arg2, %c0_i32 : i32
    %1 = arith.extui %0 : i1 to i32
    %c0_i32_0 = arith.constant 0 : i32
    %2 = arith.cmpi ne, %1, %c0_i32_0 : i32
    scf.if %2 {
      %cst_10 = arith.constant 0.000000e+00 : f32
      %13 = vector.broadcast %cst_10 : f32 to vector<16x32xf32>
      %c0_11 = arith.constant 0 : index
      %c0_12 = arith.constant 0 : index
      %14 = vector.load %arg7[%c0_11, %c0_12] : memref<16x32xf32, #tpu.memory_space<vmem>>, vector<16x32xf32>
      tpu.vector_store %arg7[%c0_11, %c0_12], %13 {strides = array<i32>} : memref<16x32xf32, #tpu.memory_space<vmem>>, vector<16x32xf32>,
    } else {
    }
    %c0 = arith.constant 0 : index
    %c0_1 = arith.constant 0 : index
    %3 = vector.load %arg7[%c0, %c0_1] : memref<16x32xf32, #tpu.memory_space<vmem>>, vector<16x32xf32>
    %c0_2 = arith.constant 0 : index
    %c0_3 = arith.constant 0 : index
    %4 = vector.load %arg3[%c0_2, %c0_3] : memref<16x32xf32, #tpu.memory_space<vmem>>, vector<16x32xf32>
    %5 = arith.truncf %4 : vector<16x32xf32> to vector<16x32xbf16>
    %c0_4 = arith.constant 0 : index
    %c0_5 = arith.constant 0 : index
    %6 = vector.load %arg4[%c0_4, %c0_5] : memref<32x32xbf16, #tpu.memory_space<vmem>>, vector<32x32xbf16>
    %cst = arith.constant dense<0.000000e+00> : vector<16x32xf32>
    %7 = tpu.matmul %5, %6, %cst {dimension_numbers = #tpu.dot_dimension_numbers<[1], [0], [0], [1], [0, 0, 1, 1], [], []>} : vector<16x32xbf16>, vector<32x32xbf16>, vector<16x32xf32> -> vector<16x32xf32>
    %8 = arith.addf %3, %7 : vector<16x32xf32>
    %c0_6 = arith.constant 0 : index
    %c0_7 = arith.constant 0 : index
    %9 = vector.load %arg7[%c0_6, %c0_7] : memref<16x32xf32, #tpu.memory_space<vmem>>, vector<16x32xf32>
    tpu.vector_store %arg7[%c0_6, %c0_7], %8 {strides = array<i32>} : memref<16x32xf32, #tpu.memory_space<vmem>>, vector<16x32xf32>,
    %c0_i32_8 = arith.constant 0 : i32
    %10 = arith.cmpi eq, %arg2, %c0_i32_8 : i32
    %11 = arith.extui %10 : i1 to i32
    %c0_i32_9 = arith.constant 0 : i32
    %12 = arith.cmpi ne, %11, %c0_i32_9 : i32
    scf.if %12 {
      %c0_10 = arith.constant 0 : index
      %c0_11 = arith.constant 0 : index
      %13 = vector.load %arg7[%c0_10, %c0_11] : memref<16x32xf32, #tpu.memory_space<vmem>>, vector<16x32xf32>
      %c0_12 = arith.constant 0 : index
      %c0_13 = arith.constant 0 : index
      %14 = vector.load %arg5[%c0_12, %c0_13] : memref<1x32xf32, #tpu.memory_space<vmem>>, vector<1x32xf32>
      %15 = vector.broadcast %14 : vector<1x32xf32> to vector<16x32xf32>
      %16 = arith.addf %13, %15 : vector<16x32xf32>
      %17 = arith.truncf %16 : vector<16x32xf32> to vector<16x32xbf16>
      %c0_14 = arith.constant 0 : index
      %c0_15 = arith.constant 0 : index
      %18 = vector.load %arg6[%c0_14, %c0_15] : memref<16x32xbf16, #tpu.memory_space<vmem>>, vector<16x32xbf16>
      tpu.vector_store %arg6[%c0_14, %c0_15], %17 {strides = array<i32>} : memref<16x32xbf16, #tpu.memory_space<vmem>>, vector<16x32xbf16>,
    } else {
    }
    return
  }
  func.func @transform_0(%arg0: i32, %arg1: i32, %arg2: i32) -> (i32, i32) {
    %c0_i32 = arith.constant 0 : i32
    return %arg0, %arg2 : i32, i32
  }
  func.func @transform_1(%arg0: i32, %arg1: i32, %arg2: i32) -> (i32, i32) {
    %c0_i32 = arith.constant 0 : i32
    return %arg2, %arg1 : i32, i32
  }
  func.func @transform_2(%arg0: i32, %arg1: i32, %arg2: i32) -> (i32, i32) {
    %c0_i32 = arith.constant 0 : i32
    %c0_i32_0 = arith.constant 0 : i32
    return %c0_i32, %arg1 : i32, i32
  }
  func.func @transform_3(%arg0: i32, %arg1: i32, %arg2: i32) -> (i32, i32) {
    %c0_i32 = arith.constant 0 : i32
    return %arg0, %arg1 : i32, i32
  }
}

module attributes {stable_mosaic.version = 11 : i64} {
  func.func @_linear_kernel(%arg0: i32, %arg1: i32, %arg2: i32, %arg3: memref<16x32xbf16, #tpu.memory_space<vmem>>, %arg4: memref<32x32xbf16, #tpu.memory_space<vmem>>, %arg5: memref<1x32xf32, #tpu.memory_space<vmem>>, %arg6: memref<16x32xf32, #tpu.memory_space<vmem>>, %arg7: memref<16x32xf32, #tpu.memory_space<vmem>>) attributes {dimension_semantics = [#tpu.dimension_semantics<parallel>, #tpu.dimension_semantics<parallel>, #tpu.dimension_semantics<arbitrary>], iteration_bounds = array<i64: 1, 1, 1>, scalar_prefetch = 0 : i64, scratch_operands = 1 : i64, tpu.core_type = #tpu.core_type<tc>, window_params = [{transform_indices = @transform_0, window_bounds = array<i64: 16, 32>}, {transform_indices = @transform_1, window_bounds = array<i64: 32, 32>}, {transform_indices = @transform_2, window_bounds = array<i64: 1, 32>}, {transform_indices = @transform_3, window_bounds = array<i64: 16, 32>}]} {
    %c0_i32 = arith.constant 0 : i32
    %0 = arith.cmpi eq, %arg2, %c0_i32 : i32
    %1 = arith.extui %0 : i1 to i32
    %c0_i32_0 = arith.constant 0 : i32
    %2 = arith.cmpi ne, %1, %c0_i32_0 : i32
    scf.if %2 {
      %cst_10 = arith.constant 0.000000e+00 : f32
      %12 = vector.broadcast %cst_10 : f32 to vector<16x32xf32>
      %c0_11 = arith.constant 0 : index
      %c0_12 = arith.constant 0 : index
      %13 = vector.load %arg7[%c0_11, %c0_12] : memref<16x32xf32, #tpu.memory_space<vmem>>, vector<16x32xf32>
      tpu.vector_store %arg7[%c0_11, %c0_12], %12 {strides = array<i32>} : memref<16x32xf32, #tpu.memory_space<vmem>>, vector<16x32xf32>,
    } else {
    }
    %c0 = arith.constant 0 : index
    %c0_1 = arith.constant 0 : index
    %3 = vector.load %arg7[%c0, %c0_1] : memref<16x32xf32, #tpu.memory_space<vmem>>, vector<16x32xf32>
    %c0_2 = arith.constant 0 : index
    %c0_3 = arith.constant 0 : index
    %4 = vector.load %arg3[%c0_2, %c0_3] : memref<16x32xbf16, #tpu.memory_space<vmem>>, vector<16x32xbf16>
    %c0_4 = arith.constant 0 : index
    %c0_5 = arith.constant 0 : index
    %5 = vector.load %arg4[%c0_4, %c0_5] : memref<32x32xbf16, #tpu.memory_space<vmem>>, vector<32x32xbf16>
    %cst = arith.constant dense<0.000000e+00> : vector<16x32xf32>
    %6 = tpu.matmul %4, %5, %cst {dimension_numbers = #tpu.dot_dimension_numbers<[1], [0], [0], [1], [0, 0, 1, 1], [], []>} : vector<16x32xbf16>, vector<32x32xbf16>, vector<16x32xf32> -> vector<16x32xf32>
    %7 = arith.addf %3, %6 : vector<16x32xf32>
    %c0_6 = arith.constant 0 : index
    %c0_7 = arith.constant 0 : index
    %8 = vector.load %arg7[%c0_6, %c0_7] : memref<16x32xf32, #tpu.memory_space<vmem>>, vector<16x32xf32>
    tpu.vector_store %arg7[%c0_6, %c0_7], %7 {strides = array<i32>} : memref<16x32xf32, #tpu.memory_space<vmem>>, vector<16x32xf32>,
    %c0_i32_8 = arith.constant 0 : i32
    %9 = arith.cmpi eq, %arg2, %c0_i32_8 : i32
    %10 = arith.extui %9 : i1 to i32
    %c0_i32_9 = arith.constant 0 : i32
    %11 = arith.cmpi ne, %10, %c0_i32_9 : i32
    scf.if %11 {
      %c0_10 = arith.constant 0 : index
      %c0_11 = arith.constant 0 : index
      %12 = vector.load %arg7[%c0_10, %c0_11] : memref<16x32xf32, #tpu.memory_space<vmem>>, vector<16x32xf32>
      %c0_12 = arith.constant 0 : index
      %c0_13 = arith.constant 0 : index
      %13 = vector.load %arg5[%c0_12, %c0_13] : memref<1x32xf32, #tpu.memory_space<vmem>>, vector<1x32xf32>
      %14 = vector.broadcast %13 : vector<1x32xf32> to vector<16x32xf32>
      %15 = arith.addf %12, %14 : vector<16x32xf32>
      %c0_14 = arith.constant 0 : index
      %c0_15 = arith.constant 0 : index
      %16 = vector.load %arg6[%c0_14, %c0_15] : memref<16x32xf32, #tpu.memory_space<vmem>>, vector<16x32xf32>
      tpu.vector_store %arg6[%c0_14, %c0_15], %15 {strides = array<i32>} : memref<16x32xf32, #tpu.memory_space<vmem>>, vector<16x32xf32>,
    } else {
    }
    return
  }
  func.func @transform_0(%arg0: i32, %arg1: i32, %arg2: i32) -> (i32, i32) {
    %c0_i32 = arith.constant 0 : i32
    return %arg0, %arg2 : i32, i32
  }
  func.func @transform_1(%arg0: i32, %arg1: i32, %arg2: i32) -> (i32, i32) {
    %c0_i32 = arith.constant 0 : i32
    return %arg2, %arg1 : i32, i32
  }
  func.func @transform_2(%arg0: i32, %arg1: i32, %arg2: i32) -> (i32, i32) {
    %c0_i32 = arith.constant 0 : i32
    %c0_i32_0 = arith.constant 0 : i32
    return %c0_i32, %arg1 : i32, i32
  }
  func.func @transform_3(%arg0: i32, %arg1: i32, %arg2: i32) -> (i32, i32) {
    %c0_i32 = arith.constant 0 : i32
    return %arg0, %arg1 : i32, i32
  }
}

module attributes {stable_mosaic.version = 11 : i64} {
  func.func @_attn_exact_kernel(%arg0: i32, %arg1: memref<8x2x32xbf16, #tpu.memory_space<vmem>>, %arg2: memref<8x2x32xbf16, #tpu.memory_space<vmem>>, %arg3: memref<8x2x32xbf16, #tpu.memory_space<vmem>>, %arg4: memref<8x2x32xbf16, #tpu.memory_space<vmem>>, %arg5: memref<2x8x8xf32, #tpu.memory_space<vmem>>) attributes {dimension_semantics = [#tpu.dimension_semantics<parallel>], iteration_bounds = array<i64: 1>, scalar_prefetch = 0 : i64, scratch_operands = 0 : i64, tpu.core_type = #tpu.core_type<tc>, window_params = [{transform_indices = @transform_0, window_bounds = array<i64: 8, 2, 32>}, {pipeline_mode = #tpu.pipeline_mode<synchronous>, transform_indices = @transform_1, window_bounds = array<i64: 8, 2, 32>}, {pipeline_mode = #tpu.pipeline_mode<synchronous>, transform_indices = @transform_2, window_bounds = array<i64: 8, 2, 32>}, {transform_indices = @transform_3, window_bounds = array<i64: 8, 2, 32>}, {transform_indices = @transform_4, window_bounds = array<i64: 2, 8, 8>}]} {
    %c0 = arith.constant 0 : index
    %c0_0 = arith.constant 0 : index
    %c0_1 = arith.constant 0 : index
    %0 = vector.load %arg1[%c0, %c0_0, %c0_1] : memref<8x2x32xbf16, #tpu.memory_space<vmem>>, vector<8x2x32xbf16>
    %c0_2 = arith.constant 0 : index
    %c0_3 = arith.constant 0 : index
    %c0_4 = arith.constant 0 : index
    %1 = vector.load %arg2[%c0_2, %c0_3, %c0_4] : memref<8x2x32xbf16, #tpu.memory_space<vmem>>, vector<8x2x32xbf16>
    %c0_5 = arith.constant 0 : index
    %c0_6 = arith.constant 0 : index
    %c0_7 = arith.constant 0 : index
    %2 = vector.load %arg3[%c0_5, %c0_6, %c0_7] : memref<8x2x32xbf16, #tpu.memory_space<vmem>>, vector<8x2x32xbf16>
    %cst = arith.constant 0.000000e+00 : f32
    %3 = vector.broadcast %cst : f32 to vector<8x8xf32>
    %4 = vector.extract_strided_slice %0 {offsets = [0, 0, 0], sizes = [8, 1, 8], strides = [1, 1, 1]} : vector<8x2x32xbf16> to vector<8x1x8xbf16>
    %5 = vector.shape_cast %4 : vector<8x1x8xbf16> to vector<8x8xbf16>
    %6 = vector.extract_strided_slice %1 {offsets = [0, 0, 0], sizes = [8, 1, 8], strides = [1, 1, 1]} : vector<8x2x32xbf16> to vector<8x1x8xbf16>
    %7 = vector.shape_cast %6 : vector<8x1x8xbf16> to vector<8x8xbf16>
    "tpu.trace_start"() <{level = 10 : i32, message = "qd,kd->qk"}> : () -> ()
    %cst_8 = arith.constant dense<0.000000e+00> : vector<8x8xf32>
    %8 = tpu.matmul %5, %7, %cst_8 {dimension_numbers = #tpu.dot_dimension_numbers<[1], [1], [0], [0], [0, 0, 1, 0], [], []>} : vector<8x8xbf16>, vector<8x8xbf16>, vector<8x8xf32> -> vector<8x8xf32>
    "tpu.trace_stop"() : () -> ()
    %cst_9 = arith.constant dense<0xFF800000> : vector<8xf32>
    %9 = vector.multi_reduction <maximumf>, %8, %cst_9 [1] : vector<8x8xf32> to vector<8xf32>
    %10 = vector.shape_cast %9 : vector<8xf32> to vector<8x1xf32>
    %11 = vector.broadcast %10 : vector<8x1xf32> to vector<8x8xf32>
    %12 = arith.subf %8, %11 : vector<8x8xf32>
    %13 = math.exp %12 : vector<8x8xf32>
    %cst_10 = arith.constant dense<0.000000e+00> : vector<8xf32>
    %14 = vector.multi_reduction <add>, %13, %cst_10 [1] : vector<8x8xf32> to vector<8xf32>
    %15 = vector.shape_cast %14 : vector<8xf32> to vector<8x1xf32>
    %16 = tpu.reciprocal %15 {approx = true} : vector<8x1xf32> -> vector<8x1xf32>
    %17 = arith.mulf %15, %16 : vector<8x1xf32>
    %cst_11 = arith.constant 2.000000e+00 : f32
    %18 = vector.broadcast %cst_11 : f32 to vector<8x1xf32>
    %19 = arith.subf %18, %17 : vector<8x1xf32>
    %20 = arith.mulf %16, %19 : vector<8x1xf32>
    %21 = vector.broadcast %20 : vector<8x1xf32> to vector<8x8xf32>
    %22 = arith.mulf %13, %21 : vector<8x8xf32>
    %23 = arith.addf %3, %22 : vector<8x8xf32>
    %24 = arith.truncf %22 : vector<8x8xf32> to vector<8x8xbf16>
    %25 = vector.extract_strided_slice %2 {offsets = [0, 0, 0], sizes = [8, 1, 8], strides = [1, 1, 1]} : vector<8x2x32xbf16> to vector<8x1x8xbf16>
    %26 = vector.shape_cast %25 : vector<8x1x8xbf16> to vector<8x8xbf16>
    %cst_12 = arith.constant dense<0.000000e+00> : vector<8x8xf32>
    %27 = tpu.matmul %24, %26, %cst_12 {dimension_numbers = #tpu.dot_dimension_numbers<[1], [0], [0], [1], [0, 0, 1, 1], [], []>} : vector<8x8xbf16>, vector<8x8xbf16>, vector<8x8xf32> -> vector<8x8xf32>
    %28 = vector.extract_strided_slice %0 {offsets = [0, 0, 8], sizes = [8, 1, 8], strides = [1, 1, 1]} : vector<8x2x32xbf16> to vector<8x1x8xbf16>
    %29 = vector.shape_cast %28 : vector<8x1x8xbf16> to vector<8x8xbf16>
    %30 = vector.extract_strided_slice %1 {offsets = [0, 0, 8], sizes = [8, 1, 8], strides = [1, 1, 1]} : vector<8x2x32xbf16> to vector<8x1x8xbf16>
    %31 = vector.shape_cast %30 : vector<8x1x8xbf16> to vector<8x8xbf16>
    "tpu.trace_start"() <{level = 10 : i32, message = "qd,kd->qk"}> : () -> ()
    %cst_13 = arith.constant dense<0.000000e+00> : vector<8x8xf32>
    %32 = tpu.matmul %29, %31, %cst_13 {dimension_numbers = #tpu.dot_dimension_numbers<[1], [1], [0], [0], [0, 0, 1, 0], [], []>} : vector<8x8xbf16>, vector<8x8xbf16>, vector<8x8xf32> -> vector<8x8xf32>
    "tpu.trace_stop"() : () -> ()
    %cst_14 = arith.constant dense<0xFF800000> : vector<8xf32>
    %33 = vector.multi_reduction <maximumf>, %32, %cst_14 [1] : vector<8x8xf32> to vector<8xf32>
    %34 = vector.shape_cast %33 : vector<8xf32> to vector<8x1xf32>
    %35 = vector.broadcast %34 : vector<8x1xf32> to vector<8x8xf32>
    %36 = arith.subf %32, %35 : vector<8x8xf32>
    %37 = math.exp %36 : vector<8x8xf32>
    %cst_15 = arith.constant dense<0.000000e+00> : vector<8xf32>
    %38 = vector.multi_reduction <add>, %37, %cst_15 [1] : vector<8x8xf32> to vector<8xf32>
    %39 = vector.shape_cast %38 : vector<8xf32> to vector<8x1xf32>
    %40 = tpu.reciprocal %39 {approx = true} : vector<8x1xf32> -> vector<8x1xf32>
    %41 = arith.mulf %39, %40 : vector<8x1xf32>
    %cst_16 = arith.constant 2.000000e+00 : f32
    %42 = vector.broadcast %cst_16 : f32 to vector<8x1xf32>
    %43 = arith.subf %42, %41 : vector<8x1xf32>
    %44 = arith.mulf %40, %43 : vector<8x1xf32>
    %45 = vector.broadcast %44 : vector<8x1xf32> to vector<8x8xf32>
    %46 = arith.mulf %37, %45 : vector<8x8xf32>
    %47 = arith.addf %23, %46 : vector<8x8xf32>
    %48 = arith.truncf %46 : vector<8x8xf32> to vector<8x8xbf16>
    %49 = vector.extract_strided_slice %2 {offsets = [0, 0, 8], sizes = [8, 1, 8], strides = [1, 1, 1]} : vector<8x2x32xbf16> to vector<8x1x8xbf16>
    %50 = vector.shape_cast %49 : vector<8x1x8xbf16> to vector<8x8xbf16>
    %cst_17 = arith.constant dense<0.000000e+00> : vector<8x8xf32>
    %51 = tpu.matmul %48, %50, %cst_17 {dimension_numbers = #tpu.dot_dimension_numbers<[1], [0], [0], [1], [0, 0, 1, 1], [], []>} : vector<8x8xbf16>, vector<8x8xbf16>, vector<8x8xf32> -> vector<8x8xf32>
    %52 = vector.extract_strided_slice %0 {offsets = [0, 0, 16], sizes = [8, 1, 8], strides = [1, 1, 1]} : vector<8x2x32xbf16> to vector<8x1x8xbf16>
    %53 = vector.shape_cast %52 : vector<8x1x8xbf16> to vector<8x8xbf16>
    %54 = vector.extract_strided_slice %1 {offsets = [0, 0, 16], sizes = [8, 1, 8], strides = [1, 1, 1]} : vector<8x2x32xbf16> to vector<8x1x8xbf16>
    %55 = vector.shape_cast %54 : vector<8x1x8xbf16> to vector<8x8xbf16>
    "tpu.trace_start"() <{level = 10 : i32, message = "qd,kd->qk"}> : () -> ()
    %cst_18 = arith.constant dense<0.000000e+00> : vector<8x8xf32>
    %56 = tpu.matmul %53, %55, %cst_18 {dimension_numbers = #tpu.dot_dimension_numbers<[1], [1], [0], [0], [0, 0, 1, 0], [], []>} : vector<8x8xbf16>, vector<8x8xbf16>, vector<8x8xf32> -> vector<8x8xf32>
    "tpu.trace_stop"() : () -> ()
    %cst_19 = arith.constant dense<0xFF800000> : vector<8xf32>
    %57 = vector.multi_reduction <maximumf>, %56, %cst_19 [1] : vector<8x8xf32> to vector<8xf32>
    %58 = vector.shape_cast %57 : vector<8xf32> to vector<8x1xf32>
    %59 = vector.broadcast %58 : vector<8x1xf32> to vector<8x8xf32>
    %60 = arith.subf %56, %59 : vector<8x8xf32>
    %61 = math.exp %60 : vector<8x8xf32>
    %cst_20 = arith.constant dense<0.000000e+00> : vector<8xf32>
    %62 = vector.multi_reduction <add>, %61, %cst_20 [1] : vector<8x8xf32> to vector<8xf32>
    %63 = vector.shape_cast %62 : vector<8xf32> to vector<8x1xf32>
    %64 = tpu.reciprocal %63 {approx = true} : vector<8x1xf32> -> vector<8x1xf32>
    %65 = arith.mulf %63, %64 : vector<8x1xf32>
    %cst_21 = arith.constant 2.000000e+00 : f32
    %66 = vector.broadcast %cst_21 : f32 to vector<8x1xf32>
    %67 = arith.subf %66, %65 : vector<8x1xf32>
    %68 = arith.mulf %64, %67 : vector<8x1xf32>
    %69 = vector.broadcast %68 : vector<8x1xf32> to vector<8x8xf32>
    %70 = arith.mulf %61, %69 : vector<8x8xf32>
    %71 = arith.addf %47, %70 : vector<8x8xf32>
    %72 = arith.truncf %70 : vector<8x8xf32> to vector<8x8xbf16>
    %73 = vector.extract_strided_slice %2 {offsets = [0, 0, 16], sizes = [8, 1, 8], strides = [1, 1, 1]} : vector<8x2x32xbf16> to vector<8x1x8xbf16>
    %74 = vector.shape_cast %73 : vector<8x1x8xbf16> to vector<8x8xbf16>
    %cst_22 = arith.constant dense<0.000000e+00> : vector<8x8xf32>
    %75 = tpu.matmul %72, %74, %cst_22 {dimension_numbers = #tpu.dot_dimension_numbers<[1], [0], [0], [1], [0, 0, 1, 1], [], []>} : vector<8x8xbf16>, vector<8x8xbf16>, vector<8x8xf32> -> vector<8x8xf32>
    %76 = vector.extract_strided_slice %0 {offsets = [0, 0, 24], sizes = [8, 1, 8], strides = [1, 1, 1]} : vector<8x2x32xbf16> to vector<8x1x8xbf16>
    %77 = vector.shape_cast %76 : vector<8x1x8xbf16> to vector<8x8xbf16>
    %78 = vector.extract_strided_slice %1 {offsets = [0, 0, 24], sizes = [8, 1, 8], strides = [1, 1, 1]} : vector<8x2x32xbf16> to vector<8x1x8xbf16>
    %79 = vector.shape_cast %78 : vector<8x1x8xbf16> to vector<8x8xbf16>
    "tpu.trace_start"() <{level = 10 : i32, message = "qd,kd->qk"}> : () -> ()
    %cst_23 = arith.constant dense<0.000000e+00> : vector<8x8xf32>
    %80 = tpu.matmul %77, %79, %cst_23 {dimension_numbers = #tpu.dot_dimension_numbers<[1], [1], [0], [0], [0, 0, 1, 0], [], []>} : vector<8x8xbf16>, vector<8x8xbf16>, vector<8x8xf32> -> vector<8x8xf32>
    "tpu.trace_stop"() : () -> ()
    %cst_24 = arith.constant dense<0xFF800000> : vector<8xf32>
    %81 = vector.multi_reduction <maximumf>, %80, %cst_24 [1] : vector<8x8xf32> to vector<8xf32>
    %82 = vector.shape_cast %81 : vector<8xf32> to vector<8x1xf32>
    %83 = vector.broadcast %82 : vector<8x1xf32> to vector<8x8xf32>
    %84 = arith.subf %80, %83 : vector<8x8xf32>
    %85 = math.exp %84 : vector<8x8xf32>
    %cst_25 = arith.constant dense<0.000000e+00> : vector<8xf32>
    %86 = vector.multi_reduction <add>, %85, %cst_25 [1] : vector<8x8xf32> to vector<8xf32>
    %87 = vector.shape_cast %86 : vector<8xf32> to vector<8x1xf32>
    %88 = tpu.reciprocal %87 {approx = true} : vector<8x1xf32> -> vector<8x1xf32>
    %89 = arith.mulf %87, %88 : vector<8x1xf32>
    %cst_26 = arith.constant 2.000000e+00 : f32
    %90 = vector.broadcast %cst_26 : f32 to vector<8x1xf32>
    %91 = arith.subf %90, %89 : vector<8x1xf32>
    %92 = arith.mulf %88, %91 : vector<8x1xf32>
    %93 = vector.broadcast %92 : vector<8x1xf32> to vector<8x8xf32>
    %94 = arith.mulf %85, %93 : vector<8x8xf32>
    %95 = arith.addf %71, %94 : vector<8x8xf32>
    %96 = arith.truncf %94 : vector<8x8xf32> to vector<8x8xbf16>
    %97 = vector.extract_strided_slice %2 {offsets = [0, 0, 24], sizes = [8, 1, 8], strides = [1, 1, 1]} : vector<8x2x32xbf16> to vector<8x1x8xbf16>
    %98 = vector.shape_cast %97 : vector<8x1x8xbf16> to vector<8x8xbf16>
    %cst_27 = arith.constant dense<0.000000e+00> : vector<8x8xf32>
    %99 = tpu.matmul %96, %98, %cst_27 {dimension_numbers = #tpu.dot_dimension_numbers<[1], [0], [0], [1], [0, 0, 1, 1], [], []>} : vector<8x8xbf16>, vector<8x8xbf16>, vector<8x8xf32> -> vector<8x8xf32>
    %100 = tpu.concatenate %27, %51, %75, %99 in 1 : vector<8x8xf32>, vector<8x8xf32>, vector<8x8xf32>, vector<8x8xf32> -> vector<8x32xf32>
    %101 = arith.truncf %100 : vector<8x32xf32> to vector<8x32xbf16>
    %c0_28 = arith.constant 0 : index
    %c0_29 = arith.constant 0 : index
    %c0_30 = arith.constant 0 : index
    %102 = vector.load %arg4[%c0_28, %c0_29, %c0_30] : memref<8x2x32xbf16, #tpu.memory_space<vmem>>, vector<8x1x32xbf16>
    %103 = vector.shape_cast %102 : vector<8x1x32xbf16> to vector<8x32xbf16>
    %104 = vector.shape_cast %101 : vector<8x32xbf16> to vector<8x1x32xbf16>
    tpu.vector_store %arg4[%c0_28, %c0_29, %c0_30], %104 {strides = array<i32>} : memref<8x2x32xbf16, #tpu.memory_space<vmem>>, vector<8x1x32xbf16>,
    %cst_31 = arith.constant 2.500000e-01 : f32
    %105 = vector.broadcast %cst_31 : f32 to vector<8x8xf32>
    %106 = arith.mulf %95, %105 : vector<8x8xf32>
    %c0_32 = arith.constant 0 : index
    %c0_33 = arith.constant 0 : index
    %c0_34 = arith.constant 0 : index
    %107 = vector.load %arg5[%c0_32, %c0_33, %c0_34] : memref<2x8x8xf32, #tpu.memory_space<vmem>>, vector<1x8x8xf32>
    %108 = vector.shape_cast %107 : vector<1x8x8xf32> to vector<8x8xf32>
    %109 = vector.shape_cast %106 : vector<8x8xf32> to vector<1x8x8xf32>
    tpu.vector_store %arg5[%c0_32, %c0_33, %c0_34], %109 {strides = array<i32>} : memref<2x8x8xf32, #tpu.memory_space<vmem>>, vector<1x8x8xf32>,
    %cst_35 = arith.constant 0.000000e+00 : f32
    %110 = vector.broadcast %cst_35 : f32 to vector<8x8xf32>
    %111 = vector.extract_strided_slice %0 {offsets = [0, 1, 0], sizes = [8, 1, 8], strides = [1, 1, 1]} : vector<8x2x32xbf16> to vector<8x1x8xbf16>
    %112 = vector.shape_cast %111 : vector<8x1x8xbf16> to vector<8x8xbf16>
    %113 = vector.extract_strided_slice %1 {offsets = [0, 1, 0], sizes = [8, 1, 8], strides = [1, 1, 1]} : vector<8x2x32xbf16> to vector<8x1x8xbf16>
    %114 = vector.shape_cast %113 : vector<8x1x8xbf16> to vector<8x8xbf16>
    "tpu.trace_start"() <{level = 10 : i32, message = "qd,kd->qk"}> : () -> ()
    %cst_36 = arith.constant dense<0.000000e+00> : vector<8x8xf32>
    %115 = tpu.matmul %112, %114, %cst_36 {dimension_numbers = #tpu.dot_dimension_numbers<[1], [1], [0], [0], [0, 0, 1, 0], [], []>} : vector<8x8xbf16>, vector<8x8xbf16>, vector<8x8xf32> -> vector<8x8xf32>
    "tpu.trace_stop"() : () -> ()
    %cst_37 = arith.constant dense<0xFF800000> : vector<8xf32>
    %116 = vector.multi_reduction <maximumf>, %115, %cst_37 [1] : vector<8x8xf32> to vector<8xf32>
    %117 = vector.shape_cast %116 : vector<8xf32> to vector<8x1xf32>
    %118 = vector.broadcast %117 : vector<8x1xf32> to vector<8x8xf32>
    %119 = arith.subf %115, %118 : vector<8x8xf32>
    %120 = math.exp %119 : vector<8x8xf32>
    %cst_38 = arith.constant dense<0.000000e+00> : vector<8xf32>
    %121 = vector.multi_reduction <add>, %120, %cst_38 [1] : vector<8x8xf32> to vector<8xf32>
    %122 = vector.shape_cast %121 : vector<8xf32> to vector<8x1xf32>
    %123 = tpu.reciprocal %122 {approx = true} : vector<8x1xf32> -> vector<8x1xf32>
    %124 = arith.mulf %122, %123 : vector<8x1xf32>
    %cst_39 = arith.constant 2.000000e+00 : f32
    %125 = vector.broadcast %cst_39 : f32 to vector<8x1xf32>
    %126 = arith.subf %125, %124 : vector<8x1xf32>
    %127 = arith.mulf %123, %126 : vector<8x1xf32>
    %128 = vector.broadcast %127 : vector<8x1xf32> to vector<8x8xf32>
    %129 = arith.mulf %120, %128 : vector<8x8xf32>
    %130 = arith.addf %110, %129 : vector<8x8xf32>
    %131 = arith.truncf %129 : vector<8x8xf32> to vector<8x8xbf16>
    %132 = vector.extract_strided_slice %2 {offsets = [0, 1, 0], sizes = [8, 1, 8], strides = [1, 1, 1]} : vector<8x2x32xbf16> to vector<8x1x8xbf16>
    %133 = vector.shape_cast %132 : vector<8x1x8xbf16> to vector<8x8xbf16>
    %cst_40 = arith.constant dense<0.000000e+00> : vector<8x8xf32>
    %134 = tpu.matmul %131, %133, %cst_40 {dimension_numbers = #tpu.dot_dimension_numbers<[1], [0], [0], [1], [0, 0, 1, 1], [], []>} : vector<8x8xbf16>, vector<8x8xbf16>, vector<8x8xf32> -> vector<8x8xf32>
    %135 = vector.extract_strided_slice %0 {offsets = [0, 1, 8], sizes = [8, 1, 8], strides = [1, 1, 1]} : vector<8x2x32xbf16> to vector<8x1x8xbf16>
    %136 = vector.shape_cast %135 : vector<8x1x8xbf16> to vector<8x8xbf16>
    %137 = vector.extract_strided_slice %1 {offsets = [0, 1, 8], sizes = [8, 1, 8], strides = [1, 1, 1]} : vector<8x2x32xbf16> to vector<8x1x8xbf16>
    %138 = vector.shape_cast %137 : vector<8x1x8xbf16> to vector<8x8xbf16>
    "tpu.trace_start"() <{level = 10 : i32, message = "qd,kd->qk"}> : () -> ()
    %cst_41 = arith.constant dense<0.000000e+00> : vector<8x8xf32>
    %139 = tpu.matmul %136, %138, %cst_41 {dimension_numbers = #tpu.dot_dimension_numbers<[1], [1], [0], [0], [0, 0, 1, 0], [], []>} : vector<8x8xbf16>, vector<8x8xbf16>, vector<8x8xf32> -> vector<8x8xf32>
    "tpu.trace_stop"() : () -> ()
    %cst_42 = arith.constant dense<0xFF800000> : vector<8xf32>
    %140 = vector.multi_reduction <maximumf>, %139, %cst_42 [1] : vector<8x8xf32> to vector<8xf32>
    %141 = vector.shape_cast %140 : vector<8xf32> to vector<8x1xf32>
    %142 = vector.broadcast %141 : vector<8x1xf32> to vector<8x8xf32>
    %143 = arith.subf %139, %142 : vector<8x8xf32>
    %144 = math.exp %143 : vector<8x8xf32>
    %cst_43 = arith.constant dense<0.000000e+00> : vector<8xf32>
    %145 = vector.multi_reduction <add>, %144, %cst_43 [1] : vector<8x8xf32> to vector<8xf32>
    %146 = vector.shape_cast %145 : vector<8xf32> to vector<8x1xf32>
    %147 = tpu.reciprocal %146 {approx = true} : vector<8x1xf32> -> vector<8x1xf32>
    %148 = arith.mulf %146, %147 : vector<8x1xf32>
    %cst_44 = arith.constant 2.000000e+00 : f32
    %149 = vector.broadcast %cst_44 : f32 to vector<8x1xf32>
    %150 = arith.subf %149, %148 : vector<8x1xf32>
    %151 = arith.mulf %147, %150 : vector<8x1xf32>
    %152 = vector.broadcast %151 : vector<8x1xf32> to vector<8x8xf32>
    %153 = arith.mulf %144, %152 : vector<8x8xf32>
    %154 = arith.addf %130, %153 : vector<8x8xf32>
    %155 = arith.truncf %153 : vector<8x8xf32> to vector<8x8xbf16>
    %156 = vector.extract_strided_slice %2 {offsets = [0, 1, 8], sizes = [8, 1, 8], strides = [1, 1, 1]} : vector<8x2x32xbf16> to vector<8x1x8xbf16>
    %157 = vector.shape_cast %156 : vector<8x1x8xbf16> to vector<8x8xbf16>
    %cst_45 = arith.constant dense<0.000000e+00> : vector<8x8xf32>
    %158 = tpu.matmul %155, %157, %cst_45 {dimension_numbers = #tpu.dot_dimension_numbers<[1], [0], [0], [1], [0, 0, 1, 1], [], []>} : vector<8x8xbf16>, vector<8x8xbf16>, vector<8x8xf32> -> vector<8x8xf32>
    %159 = vector.extract_strided_slice %0 {offsets = [0, 1, 16], sizes = [8, 1, 8], strides = [1, 1, 1]} : vector<8x2x32xbf16> to vector<8x1x8xbf16>
    %160 = vector.shape_cast %159 : vector<8x1x8xbf16> to vector<8x8xbf16>
    %161 = vector.extract_strided_slice %1 {offsets = [0, 1, 16], sizes = [8, 1, 8], strides = [1, 1, 1]} : vector<8x2x32xbf16> to vector<8x1x8xbf16>
    %162 = vector.shape_cast %161 : vector<8x1x8xbf16> to vector<8x8xbf16>
    "tpu.trace_start"() <{level = 10 : i32, message = "qd,kd->qk"}> : () -> ()
    %cst_46 = arith.constant dense<0.000000e+00> : vector<8x8xf32>
    %163 = tpu.matmul %160, %162, %cst_46 {dimension_numbers = #tpu.dot_dimension_numbers<[1], [1], [0], [0], [0, 0, 1, 0], [], []>} : vector<8x8xbf16>, vector<8x8xbf16>, vector<8x8xf32> -> vector<8x8xf32>
    "tpu.trace_stop"() : () -> ()
    %cst_47 = arith.constant dense<0xFF800000> : vector<8xf32>
    %164 = vector.multi_reduction <maximumf>, %163, %cst_47 [1] : vector<8x8xf32> to vector<8xf32>
    %165 = vector.shape_cast %164 : vector<8xf32> to vector<8x1xf32>
    %166 = vector.broadcast %165 : vector<8x1xf32> to vector<8x8xf32>
    %167 = arith.subf %163, %166 : vector<8x8xf32>
    %168 = math.exp %167 : vector<8x8xf32>
    %cst_48 = arith.constant dense<0.000000e+00> : vector<8xf32>
    %169 = vector.multi_reduction <add>, %168, %cst_48 [1] : vector<8x8xf32> to vector<8xf32>
    %170 = vector.shape_cast %169 : vector<8xf32> to vector<8x1xf32>
    %171 = tpu.reciprocal %170 {approx = true} : vector<8x1xf32> -> vector<8x1xf32>
    %172 = arith.mulf %170, %171 : vector<8x1xf32>
    %cst_49 = arith.constant 2.000000e+00 : f32
    %173 = vector.broadcast %cst_49 : f32 to vector<8x1xf32>
    %174 = arith.subf %173, %172 : vector<8x1xf32>
    %175 = arith.mulf %171, %174 : vector<8x1xf32>
    %176 = vector.broadcast %175 : vector<8x1xf32> to vector<8x8xf32>
    %177 = arith.mulf %168, %176 : vector<8x8xf32>
    %178 = arith.addf %154, %177 : vector<8x8xf32>
    %179 = arith.truncf %177 : vector<8x8xf32> to vector<8x8xbf16>
    %180 = vector.extract_strided_slice %2 {offsets = [0, 1, 16], sizes = [8, 1, 8], strides = [1, 1, 1]} : vector<8x2x32xbf16> to vector<8x1x8xbf16>
    %181 = vector.shape_cast %180 : vector<8x1x8xbf16> to vector<8x8xbf16>
    %cst_50 = arith.constant dense<0.000000e+00> : vector<8x8xf32>
    %182 = tpu.matmul %179, %181, %cst_50 {dimension_numbers = #tpu.dot_dimension_numbers<[1], [0], [0], [1], [0, 0, 1, 1], [], []>} : vector<8x8xbf16>, vector<8x8xbf16>, vector<8x8xf32> -> vector<8x8xf32>
    %183 = vector.extract_strided_slice %0 {offsets = [0, 1, 24], sizes = [8, 1, 8], strides = [1, 1, 1]} : vector<8x2x32xbf16> to vector<8x1x8xbf16>
    %184 = vector.shape_cast %183 : vector<8x1x8xbf16> to vector<8x8xbf16>
    %185 = vector.extract_strided_slice %1 {offsets = [0, 1, 24], sizes = [8, 1, 8], strides = [1, 1, 1]} : vector<8x2x32xbf16> to vector<8x1x8xbf16>
    %186 = vector.shape_cast %185 : vector<8x1x8xbf16> to vector<8x8xbf16>
    "tpu.trace_start"() <{level = 10 : i32, message = "qd,kd->qk"}> : () -> ()
    %cst_51 = arith.constant dense<0.000000e+00> : vector<8x8xf32>
    %187 = tpu.matmul %184, %186, %cst_51 {dimension_numbers = #tpu.dot_dimension_numbers<[1], [1], [0], [0], [0, 0, 1, 0], [], []>} : vector<8x8xbf16>, vector<8x8xbf16>, vector<8x8xf32> -> vector<8x8xf32>
    "tpu.trace_stop"() : () -> ()
    %cst_52 = arith.constant dense<0xFF800000> : vector<8xf32>
    %188 = vector.multi_reduction <maximumf>, %187, %cst_52 [1] : vector<8x8xf32> to vector<8xf32>
    %189 = vector.shape_cast %188 : vector<8xf32> to vector<8x1xf32>
    %190 = vector.broadcast %189 : vector<8x1xf32> to vector<8x8xf32>
    %191 = arith.subf %187, %190 : vector<8x8xf32>
    %192 = math.exp %191 : vector<8x8xf32>
    %cst_53 = arith.constant dense<0.000000e+00> : vector<8xf32>
    %193 = vector.multi_reduction <add>, %192, %cst_53 [1] : vector<8x8xf32> to vector<8xf32>
    %194 = vector.shape_cast %193 : vector<8xf32> to vector<8x1xf32>
    %195 = tpu.reciprocal %194 {approx = true} : vector<8x1xf32> -> vector<8x1xf32>
    %196 = arith.mulf %194, %195 : vector<8x1xf32>
    %cst_54 = arith.constant 2.000000e+00 : f32
    %197 = vector.broadcast %cst_54 : f32 to vector<8x1xf32>
    %198 = arith.subf %197, %196 : vector<8x1xf32>
    %199 = arith.mulf %195, %198 : vector<8x1xf32>
    %200 = vector.broadcast %199 : vector<8x1xf32> to vector<8x8xf32>
    %201 = arith.mulf %192, %200 : vector<8x8xf32>
    %202 = arith.addf %178, %201 : vector<8x8xf32>
    %203 = arith.truncf %201 : vector<8x8xf32> to vector<8x8xbf16>
    %204 = vector.extract_strided_slice %2 {offsets = [0, 1, 24], sizes = [8, 1, 8], strides = [1, 1, 1]} : vector<8x2x32xbf16> to vector<8x1x8xbf16>
    %205 = vector.shape_cast %204 : vector<8x1x8xbf16> to vector<8x8xbf16>
    %cst_55 = arith.constant dense<0.000000e+00> : vector<8x8xf32>
    %206 = tpu.matmul %203, %205, %cst_55 {dimension_numbers = #tpu.dot_dimension_numbers<[1], [0], [0], [1], [0, 0, 1, 1], [], []>} : vector<8x8xbf16>, vector<8x8xbf16>, vector<8x8xf32> -> vector<8x8xf32>
    %207 = tpu.concatenate %134, %158, %182, %206 in 1 : vector<8x8xf32>, vector<8x8xf32>, vector<8x8xf32>, vector<8x8xf32> -> vector<8x32xf32>
    %208 = arith.truncf %207 : vector<8x32xf32> to vector<8x32xbf16>
    %c0_56 = arith.constant 0 : index
    %c1 = arith.constant 1 : index
    %c0_57 = arith.constant 0 : index
    %209 = vector.load %arg4[%c0_56, %c1, %c0_57] : memref<8x2x32xbf16, #tpu.memory_space<vmem>>, vector<8x1x32xbf16>
    %210 = vector.shape_cast %209 : vector<8x1x32xbf16> to vector<8x32xbf16>
    %211 = vector.shape_cast %208 : vector<8x32xbf16> to vector<8x1x32xbf16>
    tpu.vector_store %arg4[%c0_56, %c1, %c0_57], %211 {strides = array<i32>} : memref<8x2x32xbf16, #tpu.memory_space<vmem>>, vector<8x1x32xbf16>,
    %cst_58 = arith.constant 2.500000e-01 : f32
    %212 = vector.broadcast %cst_58 : f32 to vector<8x8xf32>
    %213 = arith.mulf %202, %212 : vector<8x8xf32>
    %c1_59 = arith.constant 1 : index
    %c0_60 = arith.constant 0 : index
    %c0_61 = arith.constant 0 : index
    %214 = vector.load %arg5[%c1_59, %c0_60, %c0_61] : memref<2x8x8xf32, #tpu.memory_space<vmem>>, vector<1x8x8xf32>
    %215 = vector.shape_cast %214 : vector<1x8x8xf32> to vector<8x8xf32>
    %216 = vector.shape_cast %213 : vector<8x8xf32> to vector<1x8x8xf32>
    tpu.vector_store %arg5[%c1_59, %c0_60, %c0_61], %216 {strides = array<i32>} : memref<2x8x8xf32, #tpu.memory_space<vmem>>, vector<1x8x8xf32>,
    return
  }
  func.func @transform_0(%arg0: i32) -> (i32, i32, i32) {
    %c0_i32 = arith.constant 0 : i32
    %c0_i32_0 = arith.constant 0 : i32
    %c0_i32_1 = arith.constant 0 : i32
    return %arg0, %c0_i32, %c0_i32_0 : i32, i32, i32
  }
  func.func @transform_1(%arg0: i32) -> (i32, i32, i32) {
    %c0_i32 = arith.constant 0 : i32
    %c0_i32_0 = arith.constant 0 : i32
    %c0_i32_1 = arith.constant 0 : i32
    %c0_i32_2 = arith.constant 0 : i32
    return %c0_i32, %c0_i32_0, %c0_i32_1 : i32, i32, i32
  }
  func.func @transform_2(%arg0: i32) -> (i32, i32, i32) {
    %c0_i32 = arith.constant 0 : i32
    %c0_i32_0 = arith.constant 0 : i32
    %c0_i32_1 = arith.constant 0 : i32
    %c0_i32_2 = arith.constant 0 : i32
    return %c0_i32, %c0_i32_0, %c0_i32_1 : i32, i32, i32
  }
  func.func @transform_3(%arg0: i32) -> (i32, i32, i32) {
    %c0_i32 = arith.constant 0 : i32
    %c0_i32_0 = arith.constant 0 : i32
    %c0_i32_1 = arith.constant 0 : i32
    return %arg0, %c0_i32, %c0_i32_0 : i32, i32, i32
  }
  func.func @transform_4(%arg0: i32) -> (i32, i32, i32) {
    %c0_i32 = arith.constant 0 : i32
    %c0_i32_0 = arith.constant 0 : i32
    %c0_i32_1 = arith.constant 0 : i32
    return %c0_i32, %arg0, %c0_i32_0 : i32, i32, i32
  }
}

</mosaic_0001>

<llo_original>
// kernel: dp_multihead_attention_forward.5
$region0: #{dp_multihead_attention_forward.5}
  #allocation0 [shape = 'u32[]', space=smem, size = 0x4, offset = 0x4, fixed_abs, tag = 'smem constant byte address 0x4 - core index']
  #allocation1 [shape = 'u32[144,128]{1,0:T(1,128)}', space=vmem, size = 0x12000, scoped, tag = 'internal scratch']
  #allocation2 [shape = 'f32[16,32]{1,0:T(8,128)}', space=vmem, size = 0x2000, scoped, tag = 'scratch operand']
  %s0 = inlined_call_operand.hbm [shape: f32[16,32], index: 0, kind: input, shape index: {}]
  %s1 = inlined_call_operand.vmem [shape: bf16[32,32], index: 1, kind: input, shape index: {}]
  %s2 = inlined_call_operand.vmem [shape: f32[1,32], index: 2, kind: input, shape index: {}]
  %s3 = inlined_call_operand.vmem [shape: bf16[16,32], index: 3, kind: output, shape index: {}]
  %s4 = sld [smem:[#allocation0]]
  $region34: #{dp_multihead_attention_forward.5} parent=0
    _
  %s6 = ssub.s32 1, %s4
  %s7 = scalar_select 0, %s6, %s4
  $region1: #{dp_multihead_attention_forward.5} parent=0
    #allocation3 [shape = 'u8[8192]{0}', space=vmem, size = 0x2000, scoped, tag = 'input window, operand 0, single buffered']
    #allocation4 [shape = 's32[1]{0}', space=sflag, size = 0x4, scoped, tag = 'scoped memory for dp_multihead_attention_forward.5']
    %8 = vsyncpa [#allocation4], 0
    // Predicated region
    $region2: #{dp_multihead_attention_forward.5} parent=1 // pred_check
      _
    $region3: #{dp_multihead_attention_forward.5} parent=1 // pred_check_branch
      %10 = sbr.rel (0) target = $region5
    $region4: #{dp_multihead_attention_forward.5} parent=1 // pred_region
      %s12 = ssub.s32 256, 256
      %13 = vsyncadd [#allocation4], %s12
      %s14 = sshll.u32 [#allocation3], 4
      %s15 = int_to_ptr.vmem [resolvable:$true] %s14
      %20 = dma.hbm_to_vmem [thread:$0]  %s0, 256, %s15, [#allocation4], 128, 128, 8
    $region5: #{dp_multihead_attention_forward.5} parent=1 // pred_fallthru
      _
    // Predicated region
    $region6: #{dp_multihead_attention_forward.5} parent=1 // pred_check
      _
    $region7: #{dp_multihead_attention_forward.5} parent=1 // pred_check_branch
      %22 = sbr.rel (0) target = $region9
    $region8: #{dp_multihead_attention_forward.5} parent=1 // pred_region
      _
    $region9: #{dp_multihead_attention_forward.5} parent=1 // pred_fallthru
      _
    // Predicated region
    $region10: #{dp_multihead_attention_forward.5} parent=1 // pred_check
      _
    $region11: #{dp_multihead_attention_forward.5} parent=1 // pred_check_branch
      %24 = sbr.rel (0) target = $region13
    $region12: #{dp_multihead_attention_forward.5} parent=1 // pred_region
      _
    $region13: #{dp_multihead_attention_forward.5} parent=1 // pred_fallthru
      _
    // Predicated region
    $region14: #{dp_multihead_attention_forward.5} parent=1 // pred_check
      _
    $region15: #{dp_multihead_attention_forward.5} parent=1 // pred_check_branch
      %26 = sbr.rel (0) target = $region17
    $region16: #{dp_multihead_attention_forward.5} parent=1 // pred_region
      %27 = dma.done [#allocation4], 256
    $region17: #{dp_multihead_attention_forward.5} parent=1 // pred_fallthru
      _
    %p29 = scmp.eq.s32.totalorder 0, 0
    // Predicated region
    $region18: #{dp_multihead_attention_forward.5} parent=1 // pred_check
      %p30 = pneg %p29
    $region19: #{dp_multihead_attention_forward.5} parent=1 // pred_check_branch
      %32 = sbr.rel (%p30) target = $region21
    $region20: #{dp_multihead_attention_forward.5} parent=1 // pred_region
      %vm33 = vcmask 261120
      %34 = vst.msk [vmem:[#allocation2] sm:$0xff] %vm33, 0.0
      %35 = vst.msk [vmem:[#allocation2 + $0x8] sm:$0xff] %vm33, 0.0
    $region21: #{dp_multihead_attention_forward.5} parent=1 // pred_fallthru
      _
    %v36 = vld [vmem:[#allocation2] sm:$0xff]
    %v37 = vld [vmem:[#allocation2 + $0x8] sm:$0xff]
    %v38 = vld [vmem:[#allocation3] sm:$0xff]
    %v39 = vld [vmem:[#allocation3 + $0x8] sm:$0xff]
    %v40 = vpack.c.bf16 %v39, %v38
    %v41 = vld [vmem:[%s1] sm:$0xf]
    %v42 = vld [vmem:[%s1 + $0x4] sm:$0xf]
    %v43 = vld [vmem:[%s1 + $0x8] sm:$0xf]
    %v44 = vld [vmem:[%s1 + $0xc] sm:$0xf]
    %v49 = vunpack.c.l.b16 %v41
    %v50 = vunpack.c.l.b16 %v42
    %v51 = vunpack.c.l.b16 %v43
    %v52 = vunpack.c.l.b16 %v44
    %v53 = vpack.c.b16 %v50, %v49
    %v54 = vpack.c.b16 %v52, %v51
    %vm57 = vcmask 261120
    %v59 = vsel %vm57, %v40, 0
    %61 = vmatprep.subr.bf16.mxu0 0
    %62 = vmatpush1.bf16.msra.mxu0 %v53
    %63 = vmatprep.subr.bf16.mxu0 0
    %64 = vmatpush1.bf16.msra.mxu0 %v54
    %65 = vmatprep.subr.bf16.mxu0 0
    %66 = vmatpush1.bf16.msra.mxu0 0
    %67 = vmatprep.subr.bf16.mxu0 0
    %68 = vmatpush1.bf16.msra.mxu0 0
    %69 = vmatprep.subr.bf16.mxu0 0
    %70 = vmatpush1.bf16.msra.mxu0 0
    %71 = vmatprep.subr.bf16.mxu0 0
    %72 = vmatpush1.bf16.msra.mxu0 0
    %73 = vmatprep.subr.bf16.mxu0 0
    %74 = vmatpush1.bf16.msra.mxu0 0
    %75 = vmatprep.subr.bf16.mxu0 0
    %76 = vmatpush1.bf16.msra.mxu0 0
    %77 = vmatprep.subr.bf16.mxu0 0
    %78 = vmatpush1.bf16.msra.mxu0 0
    %79 = vmatprep.subr.bf16.mxu0 0
    %80 = vmatpush1.bf16.msra.mxu0 0
    %81 = vmatprep.subr.bf16.mxu0 0
    %82 = vmatpush1.bf16.msra.mxu0 0
    %83 = vmatprep.subr.bf16.mxu0 0
    %84 = vmatpush1.bf16.msra.mxu0 0
    %85 = vmatprep.subr.bf16.mxu0 0
    %86 = vmatpush1.bf16.msra.mxu0 0
    %87 = vmatprep.subr.bf16.mxu0 0
    %88 = vmatpush1.bf16.msra.mxu0 0
    %89 = vmatprep.subr.bf16.mxu0 0
    %90 = vmatpush1.bf16.msra.mxu0 0
    %91 = vmatprep.subr.bf16.mxu0 0
    %92 = vmatpush1.bf16.msra.mxu0 0
    %93 = vmatprep.mubr.bf16.mxu0 0
    %94 = vmatmul.mubr.bf16.gmra.mrb[0].mxu0 %v59
    %v95 = vpop.f32.mrb[0].mxu0
    %v96 = vadd.f32 0.0, %v95
    %v97 = vpop.f32.mrb[0].mxu0
    %v98 = vpop.f32.mrb[0].mxu0
    %v99 = vadd.f32 0.0, %v98
    %v100 = vpop.f32.mrb[0].mxu0
    %101 = vdwg.mxu0
    %v102 = vadd.f32 %v36, %v96
    %v103 = vadd.f32 %v37, %v99
    %104 = vst.msk [vmem:[#allocation2] sm:$0xff] %vm57, %v102
    %105 = vst.msk [vmem:[#allocation2 + $0x8] sm:$0xff] %vm57, %v103
    // Predicated region
    $region22: #{dp_multihead_attention_forward.5} parent=1 // pred_check
      %p106 = pneg %p29
    $region23: #{dp_multihead_attention_forward.5} parent=1 // pred_check_branch
      %108 = sbr.rel (%p106) target = $region25
    $region24: #{dp_multihead_attention_forward.5} parent=1 // pred_region
      %v109 = vld [vmem:[#allocation2] sm:$0xff]
      %v110 = vld [vmem:[#allocation2 + $0x8] sm:$0xff]
      %v111 = vld [vmem:[%s2] sm:$0x1]
      %v113 = vlaneseq
      %v114 = vshrl.u32 %v113, 7
      %v115 = vsub.s32 0, %v114
      %v116 = vrot.slane %v111, %v115
      %v118 = vadd.f32 %v109, %v116
      %v119 = vadd.f32 %v110, %v116
      %v120 = vpack.c.bf16 %v119, %v118
      %v122 = vunpack.c.l.b16 %v120
      %v123 = vunpack.c.h.b16 %v120
      %v124 = vpack.c.b16 %v122, %v122
      %v125 = vpack.c.b16 %v123, %v123
      %vm128 = vcmask 257024
      %129 = vst.msk [vmem:[%s3] sm:$0xf] %vm128, %v124
      %130 = vst.msk [vmem:[%s3 + $0x4] sm:$0xf] %vm128, %v125
    $region25: #{dp_multihead_attention_forward.5} parent=1 // pred_fallthru
      _
    // Predicated region
    $region26: #{dp_multihead_attention_forward.5} parent=1 // pred_check
      _
    $region27: #{dp_multihead_attention_forward.5} parent=1 // pred_check_branch
      %132 = sbr.rel (0) target = $region29
    $region28: #{dp_multihead_attention_forward.5} parent=1 // pred_region
      _
    $region29: #{dp_multihead_attention_forward.5} parent=1 // pred_fallthru
      _
    // Predicated region
    $region30: #{dp_multihead_attention_forward.5} parent=1 // pred_check
      _
    $region31: #{dp_multihead_attention_forward.5} parent=1 // pred_check_branch
      %134 = sbr.rel (0) target = $region33
    $region32: #{dp_multihead_attention_forward.5} parent=1 // pred_region
      _
    $region33: #{dp_multihead_attention_forward.5} parent=1 // pred_fallthru
      _
    %135 = vsyncpa [#allocation4], 1

// kernel: dp_multihead_attention_forward.9
$region0: #{dp_multihead_attention_forward.9}
  #allocation0 [shape = 'u32[]', space=smem, size = 0x4, offset = 0x4, fixed_abs, tag = 'smem constant byte address 0x4 - core index']
  #allocation1 [shape = 'u32[144,128]{1,0:T(1,128)}', space=vmem, size = 0x12000, scoped, tag = 'internal scratch']
  #allocation2 [shape = 'f32[16,32]{1,0:T(8,128)}', space=vmem, size = 0x2000, scoped, tag = 'scratch operand']
  %s0 = inlined_call_operand.vmem [shape: bf16[16,32], index: 0, kind: input, shape index: {}]
  %s1 = inlined_call_operand.vmem [shape: bf16[32,32], index: 1, kind: input, shape index: {}]
  %s2 = inlined_call_operand.vmem [shape: f32[1,32], index: 2, kind: input, shape index: {}]
  %s3 = inlined_call_operand.hbm [shape: f32[16,32], index: 3, kind: output, shape index: {}]
  %s4 = sld [smem:[#allocation0]]
  $region30: #{dp_multihead_attention_forward.9} parent=0
    _
  %s6 = ssub.s32 1, %s4
  %s7 = scalar_select 0, %s6, %s4
  $region1: #{dp_multihead_attention_forward.9} parent=0
    #allocation3 [shape = 'u8[8192]{0}', space=vmem, size = 0x2000, scoped, tag = 'output window, operand 0, single buffered']
    #allocation4 [shape = 's32[1]{0}', space=sflag, size = 0x4, scoped, tag = 'scoped memory for dp_multihead_attention_forward.9']
    %8 = vsyncpa [#allocation4], 0
    // Predicated region
    $region2: #{dp_multihead_attention_forward.9} parent=1 // pred_check
      _
    $region3: #{dp_multihead_attention_forward.9} parent=1 // pred_check_branch
      %10 = sbr.rel (0) target = $region5
    $region4: #{dp_multihead_attention_forward.9} parent=1 // pred_region
      _
    $region5: #{dp_multihead_attention_forward.9} parent=1 // pred_fallthru
      _
    // Predicated region
    $region6: #{dp_multihead_attention_forward.9} parent=1 // pred_check
      _
    $region7: #{dp_multihead_attention_forward.9} parent=1 // pred_check_branch
      %12 = sbr.rel (0) target = $region9
    $region8: #{dp_multihead_attention_forward.9} parent=1 // pred_region
      _
    $region9: #{dp_multihead_attention_forward.9} parent=1 // pred_fallthru
      _
    // Predicated region
    $region10: #{dp_multihead_attention_forward.9} parent=1 // pred_check
      _
    $region11: #{dp_multihead_attention_forward.9} parent=1 // pred_check_branch
      %14 = sbr.rel (0) target = $region13
    $region12: #{dp_multihead_attention_forward.9} parent=1 // pred_region
      _
    $region13: #{dp_multihead_attention_forward.9} parent=1 // pred_fallthru
      _
    %p16 = scmp.eq.s32.totalorder 0, 0
    // Predicated region
    $region14: #{dp_multihead_attention_forward.9} parent=1 // pred_check
      %p17 = pneg %p16
    $region15: #{dp_multihead_attention_forward.9} parent=1 // pred_check_branch
      %19 = sbr.rel (%p17) target = $region17
    $region16: #{dp_multihead_attention_forward.9} parent=1 // pred_region
      %vm20 = vcmask 261120
      %21 = vst.msk [vmem:[#allocation2] sm:$0xff] %vm20, 0.0
      %22 = vst.msk [vmem:[#allocation2 + $0x8] sm:$0xff] %vm20, 0.0
    $region17: #{dp_multihead_attention_forward.9} parent=1 // pred_fallthru
      _
    %v23 = vld [vmem:[#allocation2] sm:$0xff]
    %v24 = vld [vmem:[#allocation2 + $0x8] sm:$0xff]
    %v25 = vld [vmem:[%s0] sm:$0xf]
    %v26 = vld [vmem:[%s0 + $0x4] sm:$0xf]
    %v27 = vld [vmem:[%s1] sm:$0xf]
    %v28 = vld [vmem:[%s1 + $0x4] sm:$0xf]
    %v29 = vld [vmem:[%s1 + $0x8] sm:$0xf]
    %v30 = vld [vmem:[%s1 + $0xc] sm:$0xf]
    %v33 = vunpack.c.l.b16 %v25
    %v34 = vunpack.c.l.b16 %v26
    %v35 = vpack.c.b16 %v34, %v33
    %v40 = vunpack.c.l.b16 %v27
    %v41 = vunpack.c.l.b16 %v28
    %v42 = vunpack.c.l.b16 %v29
    %v43 = vunpack.c.l.b16 %v30
    %v44 = vpack.c.b16 %v41, %v40
    %v45 = vpack.c.b16 %v43, %v42
    %vm48 = vcmask 261120
    %v50 = vsel %vm48, %v35, 0
    %52 = vmatprep.subr.bf16.mxu0 0
    %53 = vmatpush1.bf16.msra.mxu0 %v44
    %54 = vmatprep.subr.bf16.mxu0 0
    %55 = vmatpush1.bf16.msra.mxu0 %v45
    %56 = vmatprep.subr.bf16.mxu0 0
    %57 = vmatpush1.bf16.msra.mxu0 0
    %58 = vmatprep.subr.bf16.mxu0 0
    %59 = vmatpush1.bf16.msra.mxu0 0
    %60 = vmatprep.subr.bf16.mxu0 0
    %61 = vmatpush1.bf16.msra.mxu0 0
    %62 = vmatprep.subr.bf16.mxu0 0
    %63 = vmatpush1.bf16.msra.mxu0 0
    %64 = vmatprep.subr.bf16.mxu0 0
    %65 = vmatpush1.bf16.msra.mxu0 0
    %66 = vmatprep.subr.bf16.mxu0 0
    %67 = vmatpush1.bf16.msra.mxu0 0
    %68 = vmatprep.subr.bf16.mxu0 0
    %69 = vmatpush1.bf16.msra.mxu0 0
    %70 = vmatprep.subr.bf16.mxu0 0
    %71 = vmatpush1.bf16.msra.mxu0 0
    %72 = vmatprep.subr.bf16.mxu0 0
    %73 = vmatpush1.bf16.msra.mxu0 0
    %74 = vmatprep.subr.bf16.mxu0 0
    %75 = vmatpush1.bf16.msra.mxu0 0
    %76 = vmatprep.subr.bf16.mxu0 0
    %77 = vmatpush1.bf16.msra.mxu0 0
    %78 = vmatprep.subr.bf16.mxu0 0
    %79 = vmatpush1.bf16.msra.mxu0 0
    %80 = vmatprep.subr.bf16.mxu0 0
    %81 = vmatpush1.bf16.msra.mxu0 0
    %82 = vmatprep.subr.bf16.mxu0 0
    %83 = vmatpush1.bf16.msra.mxu0 0
    %84 = vmatprep.mubr.bf16.mxu0 0
    %85 = vmatmul.mubr.bf16.gmra.mrb[0].mxu0 %v50
    %v86 = vpop.f32.mrb[0].mxu0
    %v87 = vadd.f32 0.0, %v86
    %v88 = vpop.f32.mrb[0].mxu0
    %v89 = vpop.f32.mrb[0].mxu0
    %v90 = vadd.f32 0.0, %v89
    %v91 = vpop.f32.mrb[0].mxu0
    %92 = vdwg.mxu0
    %v93 = vadd.f32 %v23, %v87
    %v94 = vadd.f32 %v24, %v90
    %95 = vst.msk [vmem:[#allocation2] sm:$0xff] %vm48, %v93
    %96 = vst.msk [vmem:[#allocation2 + $0x8] sm:$0xff] %vm48, %v94
    // Predicated region
    $region18: #{dp_multihead_attention_forward.9} parent=1 // pred_check
      %p97 = pneg %p16
    $region19: #{dp_multihead_attention_forward.9} parent=1 // pred_check_branch
      %99 = sbr.rel (%p97) target = $region21
    $region20: #{dp_multihead_attention_forward.9} parent=1 // pred_region
      %v100 = vld [vmem:[#allocation2] sm:$0xff]
      %v101 = vld [vmem:[#allocation2 + $0x8] sm:$0xff]
      %v102 = vld [vmem:[%s2] sm:$0x1]
      %v104 = vlaneseq
      %v105 = vshrl.u32 %v104, 7
      %v106 = vsub.s32 0, %v105
      %v107 = vrot.slane %v102, %v106
      %v109 = vadd.f32 %v100, %v107
      %v110 = vadd.f32 %v101, %v107
      %111 = vst.msk [vmem:[#allocation3] sm:$0xff] %vm48, %v109
      %112 = vst.msk [vmem:[#allocation3 + $0x8] sm:$0xff] %vm48, %v110
    $region21: #{dp_multihead_attention_forward.9} parent=1 // pred_fallthru
      _
    // Predicated region
    $region22: #{dp_multihead_attention_forward.9} parent=1 // pred_check
      _
    $region23: #{dp_multihead_attention_forward.9} parent=1 // pred_check_branch
      %114 = sbr.rel (0) target = $region25
    $region24: #{dp_multihead_attention_forward.9} parent=1 // pred_region
      %s116 = ssub.s32 256, 256
      %117 = vsyncadd [#allocation4], %s116
      %s118 = sshll.u32 [#allocation3], 4
      %s119 = int_to_ptr.vmem [resolvable:$true] %s118
      %124 = dma.vmem_to_hbm [thread:$0]  %s119, 256, %s3, [#allocation4], 128, 128, 8
    $region25: #{dp_multihead_attention_forward.9} parent=1 // pred_fallthru
      _
    // Predicated region
    $region26: #{dp_multihead_attention_forward.9} parent=1 // pred_check
      _
    $region27: #{dp_multihead_attention_forward.9} parent=1 // pred_check_branch
      %126 = sbr.rel (0) target = $region29
    $region28: #{dp_multihead_attention_forward.9} parent=1 // pred_region
      %127 = dma.done [#allocation4], 256
    $region29: #{dp_multihead_attention_forward.9} parent=1 // pred_fallthru
      _
    %128 = vsyncpa [#allocation4], 1

// kernel: dp_multihead_attention_forward.6
$region0: #{dp_multihead_attention_forward.6}
  #allocation0 [shape = 'u32[]', space=smem, size = 0x4, offset = 0x4, fixed_abs, tag = 'smem constant byte address 0x4 - core index']
  #allocation1 [shape = 'u32[144,128]{1,0:T(1,128)}', space=vmem, size = 0x12000, scoped, tag = 'internal scratch']
  #allocation2 [shape = 'f32[16,32]{1,0:T(8,128)}', space=vmem, size = 0x2000, scoped, tag = 'scratch operand']
  %s0 = inlined_call_operand.vmem [shape: f32[16,32], index: 0, kind: input, shape index: {}]
  %s1 = inlined_call_operand.vmem [shape: bf16[32,32], index: 1, kind: input, shape index: {}]
  %s2 = inlined_call_operand.vmem [shape: f32[1,32], index: 2, kind: input, shape index: {}]
  %s3 = inlined_call_operand.vmem [shape: bf16[16,32], index: 3, kind: output, shape index: {}]
  %s4 = sld [smem:[#allocation0]]
  $region30: #{dp_multihead_attention_forward.6} parent=0
    _
  %s6 = ssub.s32 1, %s4
  %s7 = scalar_select 0, %s6, %s4
  // Predicated region
  $region2: #{dp_multihead_attention_forward.6} parent=0 // pred_check
    _
  $region3: #{dp_multihead_attention_forward.6} parent=0 // pred_check_branch
    %9 = sbr.rel (0) target = $region5
  $region4: #{dp_multihead_attention_forward.6} parent=0 // pred_region
    _
  $region5: #{dp_multihead_attention_forward.6} parent=0 // pred_fallthru
    _
  // Predicated region
  $region6: #{dp_multihead_attention_forward.6} parent=0 // pred_check
    _
  $region7: #{dp_multihead_attention_forward.6} parent=0 // pred_check_branch
    %11 = sbr.rel (0) target = $region9
  $region8: #{dp_multihead_attention_forward.6} parent=0 // pred_region
    _
  $region9: #{dp_multihead_attention_forward.6} parent=0 // pred_fallthru
    _
  // Predicated region
  $region10: #{dp_multihead_attention_forward.6} parent=0 // pred_check
    _
  $region11: #{dp_multihead_attention_forward.6} parent=0 // pred_check_branch
    %13 = sbr.rel (0) target = $region13
  $region12: #{dp_multihead_attention_forward.6} parent=0 // pred_region
    _
  $region13: #{dp_multihead_attention_forward.6} parent=0 // pred_fallthru
    _
  %p15 = scmp.eq.s32.totalorder 0, 0
  // Predicated region
  $region14: #{dp_multihead_attention_forward.6} parent=0 // pred_check
    %p16 = pneg %p15
  $region15: #{dp_multihead_attention_forward.6} parent=0 // pred_check_branch
    %18 = sbr.rel (%p16) target = $region17
  $region16: #{dp_multihead_attention_forward.6} parent=0 // pred_region
    %vm19 = vcmask 261120
    %20 = vst.msk [vmem:[#allocation2] sm:$0xff] %vm19, 0.0
    %21 = vst.msk [vmem:[#allocation2 + $0x8] sm:$0xff] %vm19, 0.0
  $region17: #{dp_multihead_attention_forward.6} parent=0 // pred_fallthru
    _
  %v22 = vld [vmem:[#allocation2] sm:$0xff]
  %v23 = vld [vmem:[#allocation2 + $0x8] sm:$0xff]
  %v24 = vld [vmem:[%s0] sm:$0xff]
  %v25 = vld [vmem:[%s0 + $0x8] sm:$0xff]
  %v26 = vpack.c.bf16 %v25, %v24
  %v27 = vld [vmem:[%s1] sm:$0xf]
  %v28 = vld [vmem:[%s1 + $0x4] sm:$0xf]
  %v29 = vld [vmem:[%s1 + $0x8] sm:$0xf]
  %v30 = vld [vmem:[%s1 + $0xc] sm:$0xf]
  %v35 = vunpack.c.l.b16 %v27
  %v36 = vunpack.c.l.b16 %v28
  %v37 = vunpack.c.l.b16 %v29
  %v38 = vunpack.c.l.b16 %v30
  %v39 = vpack.c.b16 %v36, %v35
  %v40 = vpack.c.b16 %v38, %v37
  %vm43 = vcmask 261120
  %v45 = vsel %vm43, %v26, 0
  %47 = vmatprep.subr.bf16.mxu0 0
  %48 = vmatpush1.bf16.msra.mxu0 %v39
  %49 = vmatprep.subr.bf16.mxu0 0
  %50 = vmatpush1.bf16.msra.mxu0 %v40
  %51 = vmatprep.subr.bf16.mxu0 0
  %52 = vmatpush1.bf16.msra.mxu0 0
  %53 = vmatprep.subr.bf16.mxu0 0
  %54 = vmatpush1.bf16.msra.mxu0 0
  %55 = vmatprep.subr.bf16.mxu0 0
  %56 = vmatpush1.bf16.msra.mxu0 0
  %57 = vmatprep.subr.bf16.mxu0 0
  %58 = vmatpush1.bf16.msra.mxu0 0
  %59 = vmatprep.subr.bf16.mxu0 0
  %60 = vmatpush1.bf16.msra.mxu0 0
  %61 = vmatprep.subr.bf16.mxu0 0
  %62 = vmatpush1.bf16.msra.mxu0 0
  %63 = vmatprep.subr.bf16.mxu0 0
  %64 = vmatpush1.bf16.msra.mxu0 0
  %65 = vmatprep.subr.bf16.mxu0 0
  %66 = vmatpush1.bf16.msra.mxu0 0
  %67 = vmatprep.subr.bf16.mxu0 0
  %68 = vmatpush1.bf16.msra.mxu0 0
  %69 = vmatprep.subr.bf16.mxu0 0
  %70 = vmatpush1.bf16.msra.mxu0 0
  %71 = vmatprep.subr.bf16.mxu0 0
  %72 = vmatpush1.bf16.msra.mxu0 0
  %73 = vmatprep.subr.bf16.mxu0 0
  %74 = vmatpush1.bf16.msra.mxu0 0
  %75 = vmatprep.subr.bf16.mxu0 0
  %76 = vmatpush1.bf16.msra.mxu0 0
  %77 = vmatprep.subr.bf16.mxu0 0
  %78 = vmatpush1.bf16.msra.mxu0 0
  %79 = vmatprep.mubr.bf16.mxu0 0
  %80 = vmatmul.mubr.bf16.gmra.mrb[0].mxu0 %v45
  %v81 = vpop.f32.mrb[0].mxu0
  %v82 = vadd.f32 0.0, %v81
  %v83 = vpop.f32.mrb[0].mxu0
  %v84 = vpop.f32.mrb[0].mxu0
  %v85 = vadd.f32 0.0, %v84
  %v86 = vpop.f32.mrb[0].mxu0
  %87 = vdwg.mxu0
  %v88 = vadd.f32 %v22, %v82
  %v89 = vadd.f32 %v23, %v85
  %90 = vst.msk [vmem:[#allocation2] sm:$0xff] %vm43, %v88
  %91 = vst.msk [vmem:[#allocation2 + $0x8] sm:$0xff] %vm43, %v89
  // Predicated region
  $region18: #{dp_multihead_attention_forward.6} parent=0 // pred_check
    %p92 = pneg %p15
  $region19: #{dp_multihead_attention_forward.6} parent=0 // pred_check_branch
    %94 = sbr.rel (%p92) target = $region21
  $region20: #{dp_multihead_attention_forward.6} parent=0 // pred_region
    %v95 = vld [vmem:[#allocation2] sm:$0xff]
    %v96 = vld [vmem:[#allocation2 + $0x8] sm:$0xff]
    %v97 = vld [vmem:[%s2] sm:$0x1]
    %v99 = vlaneseq
    %v100 = vshrl.u32 %v99, 7
    %v101 = vsub.s32 0, %v100
    %v102 = vrot.slane %v97, %v101
    %v104 = vadd.f32 %v95, %v102
    %v105 = vadd.f32 %v96, %v102
    %v106 = vpack.c.bf16 %v105, %v104
    %v108 = vunpack.c.l.b16 %v106
    %v109 = vunpack.c.h.b16 %v106
    %v110 = vpack.c.b16 %v108, %v108
    %v111 = vpack.c.b16 %v109, %v109
    %vm114 = vcmask 257024
    %115 = vst.msk [vmem:[%s3] sm:$0xf] %vm114, %v110
    %116 = vst.msk [vmem:[%s3 + $0x4] sm:$0xf] %vm114, %v111
  $region21: #{dp_multihead_attention_forward.6} parent=0 // pred_fallthru
    _
  // Predicated region
  $region22: #{dp_multihead_attention_forward.6} parent=0 // pred_check
    _
  $region23: #{dp_multihead_attention_forward.6} parent=0 // pred_check_branch
    %118 = sbr.rel (0) target = $region25
  $region24: #{dp_multihead_attention_forward.6} parent=0 // pred_region
    _
  $region25: #{dp_multihead_attention_forward.6} parent=0 // pred_fallthru
    _
  // Predicated region
  $region26: #{dp_multihead_attention_forward.6} parent=0 // pred_check
    _
  $region27: #{dp_multihead_attention_forward.6} parent=0 // pred_check_branch
    %120 = sbr.rel (0) target = $region29
  $region28: #{dp_multihead_attention_forward.6} parent=0 // pred_region
    _
  $region29: #{dp_multihead_attention_forward.6} parent=0 // pred_fallthru
    _

// kernel: dp_multihead_attention_forward.8
$region0: #{dp_multihead_attention_forward.8}
  #allocation0 [shape = 'u32[]', space=smem, size = 0x4, offset = 0x4, fixed_abs, tag = 'smem constant byte address 0x4 - core index']
  #allocation1 [shape = 'u32[144,128]{1,0:T(1,128)}', space=vmem, size = 0x12000, scoped, tag = 'internal scratch']
  %s0 = inlined_call_operand.vmem [shape: bf16[8,2,32], index: 0, kind: input, shape index: {}]
  %s1 = inlined_call_operand.vmem [shape: bf16[8,2,32], index: 1, kind: input, shape index: {}]
  %s2 = inlined_call_operand.vmem [shape: bf16[8,2,32], index: 2, kind: input, shape index: {}]
  %s3 = inlined_call_operand.vmem [shape: bf16[8,2,32], index: 3, kind: output, shape index: {0}]
  %s4 = inlined_call_operand.hbm [shape: f32[2,8,8], index: 4, kind: output, shape index: {1}]
  %5 = xla_tuple %s3, %s4
  %s6 = sld [smem:[#allocation0]]
  $region30: #{dp_multihead_attention_forward.8} parent=0
    _
  %s8 = ssub.s32 1, %s6
  %s9 = scalar_select 0, %s8, %s6
  $region1: #{dp_multihead_attention_forward.8} parent=0
    #allocation2 [shape = 'u8[8192]{0}', space=vmem, size = 0x2000, scoped, tag = 'output window, operand 1, single buffered']
    #allocation3 [shape = 's32[1]{0}', space=sflag, size = 0x4, scoped, tag = 'scoped memory for dp_multihead_attention_forward.8']
    %10 = vsyncpa [#allocation3], 0
    // Predicated region
    $region2: #{dp_multihead_attention_forward.8} parent=1 // pred_check
      _
    $region3: #{dp_multihead_attention_forward.8} parent=1 // pred_check_branch
      %12 = sbr.rel (0) target = $region5
    $region4: #{dp_multihead_attention_forward.8} parent=1 // pred_region
      _
    $region5: #{dp_multihead_attention_forward.8} parent=1 // pred_fallthru
      _
    // Predicated region
    $region6: #{dp_multihead_attention_forward.8} parent=1 // pred_check
      _
    $region7: #{dp_multihead_attention_forward.8} parent=1 // pred_check_branch
      %14 = sbr.rel (0) target = $region9
    $region8: #{dp_multihead_attention_forward.8} parent=1 // pred_region
      _
    $region9: #{dp_multihead_attention_forward.8} parent=1 // pred_fallthru
      _
    // Predicated region
    $region10: #{dp_multihead_attention_forward.8} parent=1 // pred_check
      _
    $region11: #{dp_multihead_attention_forward.8} parent=1 // pred_check_branch
      %16 = sbr.rel (0) target = $region13
    $region12: #{dp_multihead_attention_forward.8} parent=1 // pred_region
      _
    $region13: #{dp_multihead_attention_forward.8} parent=1 // pred_fallthru
      _
    %v18 = vld [vmem:[%s0] sm:$0x1]
    %v19 = vld [vmem:[%s0 + $0x1] sm:$0x1]
    %v20 = vld [vmem:[%s0 + $0x2] sm:$0x1]
    %v21 = vld [vmem:[%s0 + $0x3] sm:$0x1]
    %v22 = vld [vmem:[%s0 + $0x4] sm:$0x1]
    %v23 = vld [vmem:[%s0 + $0x5] sm:$0x1]
    %v24 = vld [vmem:[%s0 + $0x6] sm:$0x1]
    %v25 = vld [vmem:[%s0 + $0x7] sm:$0x1]
    %v26 = vld [vmem:[%s1] sm:$0x1]
    %v27 = vld [vmem:[%s1 + $0x1] sm:$0x1]
    %v28 = vld [vmem:[%s1 + $0x2] sm:$0x1]
    %v29 = vld [vmem:[%s1 + $0x3] sm:$0x1]
    %v30 = vld [vmem:[%s1 + $0x4] sm:$0x1]
    %v31 = vld [vmem:[%s1 + $0x5] sm:$0x1]
    %v32 = vld [vmem:[%s1 + $0x6] sm:$0x1]
    %v33 = vld [vmem:[%s1 + $0x7] sm:$0x1]
    %v34 = vld [vmem:[%s2] sm:$0x1]
    %v35 = vld [vmem:[%s2 + $0x1] sm:$0x1]
    %v36 = vld [vmem:[%s2 + $0x2] sm:$0x1]
    %v37 = vld [vmem:[%s2 + $0x3] sm:$0x1]
    %v38 = vld [vmem:[%s2 + $0x4] sm:$0x1]
    %v39 = vld [vmem:[%s2 + $0x5] sm:$0x1]
    %v40 = vld [vmem:[%s2 + $0x6] sm:$0x1]
    %v41 = vld [vmem:[%s2 + $0x7] sm:$0x1]
    %v51 = vunpack.c.l.s4 1966171168
    %v52 = vunpack.c.0.s8 %v51
    %v53 = vlaneseq
    %v54 = vshrl.u32 %v53, 7
    %v55 = vsub.s32 %v52, %v54
    %v56 = vrot.slane %v18, %v55
    %v58 = vunpack.c.l.s4 1966171168
    %v59 = vunpack.c.0.s8 %v58
    %v60 = vlaneseq
    %v61 = vshrl.u32 %v60, 7
    %v62 = vsub.s32 %v59, %v61
    %v63 = vrot.slane %v56, %v62
    %v65 = vunpack.c.l.s4 1966171168
    %v66 = vunpack.c.0.s8 %v65
    %v67 = vlaneseq
    %v68 = vshrl.u32 %v67, 7
    %v69 = vsub.s32 %v66, %v68
    %v70 = vrot.slane %v19, %v69
    %v72 = vunpack.c.l.s4 1966171168
    %v73 = vunpack.c.0.s8 %v72
    %v74 = vlaneseq
    %v75 = vshrl.u32 %v74, 7
    %v76 = vsub.s32 %v73, %v75
    %v77 = vrot.slane %v70, %v76
    %v79 = vunpack.c.l.s4 1966171168
    %v80 = vunpack.c.0.s8 %v79
    %v81 = vlaneseq
    %v82 = vshrl.u32 %v81, 7
    %v83 = vsub.s32 %v80, %v82
    %v84 = vrot.slane %v20, %v83
    %v86 = vunpack.c.l.s4 1966171168
    %v87 = vunpack.c.0.s8 %v86
    %v88 = vlaneseq
    %v89 = vshrl.u32 %v88, 7
    %v90 = vsub.s32 %v87, %v89
    %v91 = vrot.slane %v84, %v90
    %v93 = vunpack.c.l.s4 1966171168
    %v94 = vunpack.c.0.s8 %v93
    %v95 = vlaneseq
    %v96 = vshrl.u32 %v95, 7
    %v97 = vsub.s32 %v94, %v96
    %v98 = vrot.slane %v21, %v97
    %v100 = vunpack.c.l.s4 1966171168
    %v101 = vunpack.c.0.s8 %v100
    %v102 = vlaneseq
    %v103 = vshrl.u32 %v102, 7
    %v104 = vsub.s32 %v101, %v103
    %v105 = vrot.slane %v98, %v104
    %v107 = vunpack.c.l.s4 1966171168
    %v108 = vunpack.c.0.s8 %v107
    %v109 = vlaneseq
    %v110 = vshrl.u32 %v109, 7
    %v111 = vsub.s32 %v108, %v110
    %v112 = vrot.slane %v22, %v111
    %v114 = vunpack.c.l.s4 1966171168
    %v115 = vunpack.c.0.s8 %v114
    %v116 = vlaneseq
    %v117 = vshrl.u32 %v116, 7
    %v118 = vsub.s32 %v115, %v117
    %v119 = vrot.slane %v112, %v118
    %v121 = vunpack.c.l.s4 1966171168
    %v122 = vunpack.c.0.s8 %v121
    %v123 = vlaneseq
    %v124 = vshrl.u32 %v123, 7
    %v125 = vsub.s32 %v122, %v124
    %v126 = vrot.slane %v23, %v125
    %v128 = vunpack.c.l.s4 1966171168
    %v129 = vunpack.c.0.s8 %v128
    %v130 = vlaneseq
    %v131 = vshrl.u32 %v130, 7
    %v132 = vsub.s32 %v129, %v131
    %v133 = vrot.slane %v126, %v132
    %v135 = vunpack.c.l.s4 1966171168
    %v136 = vunpack.c.0.s8 %v135
    %v137 = vlaneseq
    %v138 = vshrl.u32 %v137, 7
    %v139 = vsub.s32 %v136, %v138
    %v140 = vrot.slane %v24, %v139
    %v142 = vunpack.c.l.s4 1966171168
    %v143 = vunpack.c.0.s8 %v142
    %v144 = vlaneseq
    %v145 = vshrl.u32 %v144, 7
    %v146 = vsub.s32 %v143, %v145
    %v147 = vrot.slane %v140, %v146
    %v149 = vunpack.c.l.s4 1966171168
    %v150 = vunpack.c.0.s8 %v149
    %v151 = vlaneseq
    %v152 = vshrl.u32 %v151, 7
    %v153 = vsub.s32 %v150, %v152
    %v154 = vrot.slane %v25, %v153
    %v156 = vunpack.c.l.s4 1966171168
    %v157 = vunpack.c.0.s8 %v156
    %v158 = vlaneseq
    %v159 = vshrl.u32 %v158, 7
    %v160 = vsub.s32 %v157, %v159
    %v161 = vrot.slane %v154, %v160
    %v162 = vunpack.c.l.b16 %v63
    %v163 = vunpack.c.l.b16 %v77
    %v164 = vunpack.c.l.b16 %v91
    %v165 = vunpack.c.l.b16 %v105
    %v166 = vunpack.c.l.b16 %v119
    %v167 = vunpack.c.l.b16 %v133
    %v168 = vunpack.c.l.b16 %v147
    %v169 = vunpack.c.l.b16 %v161
    %v170 = vrot.slane %v163, 7
    %vm171 = vcmask 1041409
    %v172 = vsel %vm171, %v170, %v162
    %v173 = vrot.slane %v164, 6
    %vm174 = vcmask 1042434
    %v175 = vsel %vm174, %v173, %v172
    %v176 = vrot.slane %v165, 5
    %vm177 = vcmask 1043459
    %v178 = vsel %vm177, %v176, %v175
    %v179 = vrot.slane %v166, 4
    %vm180 = vcmask 1044484
    %v181 = vsel %vm180, %v179, %v178
    %v182 = vrot.slane %v167, 3
    %vm183 = vcmask 1045509
    %v184 = vsel %vm183, %v182, %v181
    %v185 = vrot.slane %v168, 2
    %vm186 = vcmask 1046534
    %v187 = vsel %vm186, %v185, %v184
    %v188 = vrot.slane %v169, 1
    %vm189 = vcmask 1047559
    %v190 = vsel %vm189, %v188, %v187
    %v191 = vpack.c.b16 %v190, %v190
    %v201 = vunpack.c.l.s4 1966171168
    %v202 = vunpack.c.0.s8 %v201
    %v203 = vlaneseq
    %v204 = vshrl.u32 %v203, 7
    %v205 = vsub.s32 %v202, %v204
    %v206 = vrot.slane %v26, %v205
    %v208 = vunpack.c.l.s4 1966171168
    %v209 = vunpack.c.0.s8 %v208
    %v210 = vlaneseq
    %v211 = vshrl.u32 %v210, 7
    %v212 = vsub.s32 %v209, %v211
    %v213 = vrot.slane %v206, %v212
    %v215 = vunpack.c.l.s4 1966171168
    %v216 = vunpack.c.0.s8 %v215
    %v217 = vlaneseq
    %v218 = vshrl.u32 %v217, 7
    %v219 = vsub.s32 %v216, %v218
    %v220 = vrot.slane %v27, %v219
    %v222 = vunpack.c.l.s4 1966171168
    %v223 = vunpack.c.0.s8 %v222
    %v224 = vlaneseq
    %v225 = vshrl.u32 %v224, 7
    %v226 = vsub.s32 %v223, %v225
    %v227 = vrot.slane %v220, %v226
    %v229 = vunpack.c.l.s4 1966171168
    %v230 = vunpack.c.0.s8 %v229
    %v231 = vlaneseq
    %v232 = vshrl.u32 %v231, 7
    %v233 = vsub.s32 %v230, %v232
    %v234 = vrot.slane %v28, %v233
    %v236 = vunpack.c.l.s4 1966171168
    %v237 = vunpack.c.0.s8 %v236
    %v238 = vlaneseq
    %v239 = vshrl.u32 %v238, 7
    %v240 = vsub.s32 %v237, %v239
    %v241 = vrot.slane %v234, %v240
    %v243 = vunpack.c.l.s4 1966171168
    %v244 = vunpack.c.0.s8 %v243
    %v245 = vlaneseq
    %v246 = vshrl.u32 %v245, 7
    %v247 = vsub.s32 %v244, %v246
    %v248 = vrot.slane %v29, %v247
    %v250 = vunpack.c.l.s4 1966171168
    %v251 = vunpack.c.0.s8 %v250
    %v252 = vlaneseq
    %v253 = vshrl.u32 %v252, 7
    %v254 = vsub.s32 %v251, %v253
    %v255 = vrot.slane %v248, %v254
    %v257 = vunpack.c.l.s4 1966171168
    %v258 = vunpack.c.0.s8 %v257
    %v259 = vlaneseq
    %v260 = vshrl.u32 %v259, 7
    %v261 = vsub.s32 %v258, %v260
    %v262 = vrot.slane %v30, %v261
    %v264 = vunpack.c.l.s4 1966171168
    %v265 = vunpack.c.0.s8 %v264
    %v266 = vlaneseq
    %v267 = vshrl.u32 %v266, 7
    %v268 = vsub.s32 %v265, %v267
    %v269 = vrot.slane %v262, %v268
    %v271 = vunpack.c.l.s4 1966171168
    %v272 = vunpack.c.0.s8 %v271
    %v273 = vlaneseq
    %v274 = vshrl.u32 %v273, 7
    %v275 = vsub.s32 %v272, %v274
    %v276 = vrot.slane %v31, %v275
    %v278 = vunpack.c.l.s4 1966171168
    %v279 = vunpack.c.0.s8 %v278
    %v280 = vlaneseq
    %v281 = vshrl.u32 %v280, 7
    %v282 = vsub.s32 %v279, %v281
    %v283 = vrot.slane %v276, %v282
    %v285 = vunpack.c.l.s4 1966171168
    %v286 = vunpack.c.0.s8 %v285
    %v287 = vlaneseq
    %v288 = vshrl.u32 %v287, 7
    %v289 = vsub.s32 %v286, %v288
    %v290 = vrot.slane %v32, %v289
    %v292 = vunpack.c.l.s4 1966171168
    %v293 = vunpack.c.0.s8 %v292
    %v294 = vlaneseq
    %v295 = vshrl.u32 %v294, 7
    %v296 = vsub.s32 %v293, %v295
    %v297 = vrot.slane %v290, %v296
    %v299 = vunpack.c.l.s4 1966171168
    %v300 = vunpack.c.0.s8 %v299
    %v301 = vlaneseq
    %v302 = vshrl.u32 %v301, 7
    %v303 = vsub.s32 %v300, %v302
    %v304 = vrot.slane %v33, %v303
    %v306 = vunpack.c.l.s4 1966171168
    %v307 = vunpack.c.0.s8 %v306
    %v308 = vlaneseq
    %v309 = vshrl.u32 %v308, 7
    %v310 = vsub.s32 %v307, %v309
    %v311 = vrot.slane %v304, %v310
    %v312 = vunpack.c.l.b16 %v213
    %v313 = vunpack.c.l.b16 %v227
    %v314 = vunpack.c.l.b16 %v241
    %v315 = vunpack.c.l.b16 %v255
    %v316 = vunpack.c.l.b16 %v269
    %v317 = vunpack.c.l.b16 %v283
    %v318 = vunpack.c.l.b16 %v297
    %v319 = vunpack.c.l.b16 %v311
    %v320 = vrot.slane %v313, 7
    %v321 = vsel %vm171, %v320, %v312
    %v322 = vrot.slane %v314, 6
    %v323 = vsel %vm174, %v322, %v321
    %v324 = vrot.slane %v315, 5
    %v325 = vsel %vm177, %v324, %v323
    %v326 = vrot.slane %v316, 4
    %v327 = vsel %vm180, %v326, %v325
    %v328 = vrot.slane %v317, 3
    %v329 = vsel %vm183, %v328, %v327
    %v330 = vrot.slane %v318, 2
    %v331 = vsel %vm186, %v330, %v329
    %v332 = vrot.slane %v319, 1
    %v333 = vsel %vm189, %v332, %v331
    %v334 = vpack.c.b16 %v333, %v333
    %vm335 = vcmask 64512
    %v337 = vsel %vm335, %v191, 0
    %v340 = vsel %vm335, %v334, 0
    %342 = vmatprep.subr.bf16.mxu0 0
    %343 = vmatpush1.bf16.xpose.msra.mxu0 %v340
    %344 = vmatprep.subr.bf16.mxu0 0
    %345 = vmatpush1.bf16.xpose.msra.mxu0 0
    %346 = vmatprep.subr.bf16.mxu0 0
    %347 = vmatpush1.bf16.xpose.msra.mxu0 0
    %348 = vmatprep.subr.bf16.mxu0 0
    %349 = vmatpush1.bf16.xpose.msra.mxu0 0
    %350 = vmatprep.subr.bf16.mxu0 0
    %351 = vmatpush1.bf16.xpose.msra.mxu0 0
    %352 = vmatprep.subr.bf16.mxu0 0
    %353 = vmatpush1.bf16.xpose.msra.mxu0 0
    %354 = vmatprep.subr.bf16.mxu0 0
    %355 = vmatpush1.bf16.xpose.msra.mxu0 0
    %356 = vmatprep.subr.bf16.mxu0 0
    %357 = vmatpush1.bf16.xpose.msra.mxu0 0
    %358 = vmatprep.subr.bf16.mxu0 0
    %359 = vmatpush1.bf16.xpose.msra.mxu0 0
    %360 = vmatprep.subr.bf16.mxu0 0
    %361 = vmatpush1.bf16.xpose.msra.mxu0 0
    %362 = vmatprep.subr.bf16.mxu0 0
    %363 = vmatpush1.bf16.xpose.msra.mxu0 0
    %364 = vmatprep.subr.bf16.mxu0 0
    %365 = vmatpush1.bf16.xpose.msra.mxu0 0
    %366 = vmatprep.subr.bf16.mxu0 0
    %367 = vmatpush1.bf16.xpose.msra.mxu0 0
    %368 = vmatprep.subr.bf16.mxu0 0
    %369 = vmatpush1.bf16.xpose.msra.mxu0 0
    %370 = vmatprep.subr.bf16.mxu0 0
    %371 = vmatpush1.bf16.xpose.msra.mxu0 0
    %372 = vmatprep.subr.bf16.mxu0 0
    %373 = vmatpush1.bf16.xpose.msra.mxu0 0
    %374 = vmatprep.mubr.bf16.mxu0 0
    %375 = vmatmul.mubr.bf16.gmra.mrb[0].mxu0 %v337
    %v376 = vpop.f32.mrb[0].mxu0
    %v377 = vadd.f32 0.0, %v376
    %v378 = vpop.f32.mrb[0].mxu0
    %v379 = vpop.f32.mrb[0].mxu0
    %v380 = vpop.f32.mrb[0].mxu0
    %381 = vdwg.mxu0
    %v382 = vsel %vm335, %v377, -inf
    %383 = vmax.xlane.f32.xlu0 %v382
    %v384 = vpop.xlane.xlu0 %383
    %v385 = vsub.f32 %v377, %v384
    %v386 = vmul.f32 %v385, 1.442695
    %v387 = vpow.pop %v386
    %v388 = vsel %vm335, %v387, 0.0
    %389 = vadd.xlane.f32.xlu0 %v388
    %v390 = vpop.xlane.xlu0 %389
    %v391 = vrcp.pop %v390
    %v392 = vmul.f32 %v390, %v391
    %v393 = vsub.f32 2.0, %v392
    %v394 = vmul.f32 %v391, %v393
    %v395 = vmul.f32 %v387, %v394
    %v396 = vadd.f32 %v395, 0.0
    %v397 = vpack.c.bf16 %v395, %v395
    %v407 = vunpack.c.l.s4 1966171168
    %v408 = vunpack.c.0.s8 %v407
    %v409 = vlaneseq
    %v410 = vshrl.u32 %v409, 7
    %v411 = vsub.s32 %v408, %v410
    %v412 = vrot.slane %v34, %v411
    %v414 = vunpack.c.l.s4 1966171168
    %v415 = vunpack.c.0.s8 %v414
    %v416 = vlaneseq
    %v417 = vshrl.u32 %v416, 7
    %v418 = vsub.s32 %v415, %v417
    %v419 = vrot.slane %v412, %v418
    %v421 = vunpack.c.l.s4 1966171168
    %v422 = vunpack.c.0.s8 %v421
    %v423 = vlaneseq
    %v424 = vshrl.u32 %v423, 7
    %v425 = vsub.s32 %v422, %v424
    %v426 = vrot.slane %v35, %v425
    %v428 = vunpack.c.l.s4 1966171168
    %v429 = vunpack.c.0.s8 %v428
    %v430 = vlaneseq
    %v431 = vshrl.u32 %v430, 7
    %v432 = vsub.s32 %v429, %v431
    %v433 = vrot.slane %v426, %v432
    %v435 = vunpack.c.l.s4 1966171168
    %v436 = vunpack.c.0.s8 %v435
    %v437 = vlaneseq
    %v438 = vshrl.u32 %v437, 7
    %v439 = vsub.s32 %v436, %v438
    %v440 = vrot.slane %v36, %v439
    %v442 = vunpack.c.l.s4 1966171168
    %v443 = vunpack.c.0.s8 %v442
    %v444 = vlaneseq
    %v445 = vshrl.u32 %v444, 7
    %v446 = vsub.s32 %v443, %v445
    %v447 = vrot.slane %v440, %v446
    %v449 = vunpack.c.l.s4 1966171168
    %v450 = vunpack.c.0.s8 %v449
    %v451 = vlaneseq
    %v452 = vshrl.u32 %v451, 7
    %v453 = vsub.s32 %v450, %v452
    %v454 = vrot.slane %v37, %v453
    %v456 = vunpack.c.l.s4 1966171168
    %v457 = vunpack.c.0.s8 %v456
    %v458 = vlaneseq
    %v459 = vshrl.u32 %v458, 7
    %v460 = vsub.s32 %v457, %v459
    %v461 = vrot.slane %v454, %v460
    %v463 = vunpack.c.l.s4 1966171168
    %v464 = vunpack.c.0.s8 %v463
    %v465 = vlaneseq
    %v466 = vshrl.u32 %v465, 7
    %v467 = vsub.s32 %v464, %v466
    %v468 = vrot.slane %v38, %v467
    %v470 = vunpack.c.l.s4 1966171168
    %v471 = vunpack.c.0.s8 %v470
    %v472 = vlaneseq
    %v473 = vshrl.u32 %v472, 7
    %v474 = vsub.s32 %v471, %v473
    %v475 = vrot.slane %v468, %v474
    %v477 = vunpack.c.l.s4 1966171168
    %v478 = vunpack.c.0.s8 %v477
    %v479 = vlaneseq
    %v480 = vshrl.u32 %v479, 7
    %v481 = vsub.s32 %v478, %v480
    %v482 = vrot.slane %v39, %v481
    %v484 = vunpack.c.l.s4 1966171168
    %v485 = vunpack.c.0.s8 %v484
    %v486 = vlaneseq
    %v487 = vshrl.u32 %v486, 7
    %v488 = vsub.s32 %v485, %v487
    %v489 = vrot.slane %v482, %v488
    %v491 = vunpack.c.l.s4 1966171168
    %v492 = vunpack.c.0.s8 %v491
    %v493 = vlaneseq
    %v494 = vshrl.u32 %v493, 7
    %v495 = vsub.s32 %v492, %v494
    %v496 = vrot.slane %v40, %v495
    %v498 = vunpack.c.l.s4 1966171168
    %v499 = vunpack.c.0.s8 %v498
    %v500 = vlaneseq
    %v501 = vshrl.u32 %v500, 7
    %v502 = vsub.s32 %v499, %v501
    %v503 = vrot.slane %v496, %v502
    %v505 = vunpack.c.l.s4 1966171168
    %v506 = vunpack.c.0.s8 %v505
    %v507 = vlaneseq
    %v508 = vshrl.u32 %v507, 7
    %v509 = vsub.s32 %v506, %v508
    %v510 = vrot.slane %v41, %v509
    %v512 = vunpack.c.l.s4 1966171168
    %v513 = vunpack.c.0.s8 %v512
    %v514 = vlaneseq
    %v515 = vshrl.u32 %v514, 7
    %v516 = vsub.s32 %v513, %v515
    %v517 = vrot.slane %v510, %v516
    %v518 = vunpack.c.l.b16 %v419
    %v519 = vunpack.c.l.b16 %v433
    %v520 = vunpack.c.l.b16 %v447
    %v521 = vunpack.c.l.b16 %v461
    %v522 = vunpack.c.l.b16 %v475
    %v523 = vunpack.c.l.b16 %v489
    %v524 = vunpack.c.l.b16 %v503
    %v525 = vunpack.c.l.b16 %v517
    %v526 = vrot.slane %v519, 7
    %v527 = vsel %vm171, %v526, %v518
    %v528 = vrot.slane %v520, 6
    %v529 = vsel %vm174, %v528, %v527
    %v530 = vrot.slane %v521, 5
    %v531 = vsel %vm177, %v530, %v529
    %v532 = vrot.slane %v522, 4
    %v533 = vsel %vm180, %v532, %v531
    %v534 = vrot.slane %v523, 3
    %v535 = vsel %vm183, %v534, %v533
    %v536 = vrot.slane %v524, 2
    %v537 = vsel %vm186, %v536, %v535
    %v538 = vrot.slane %v525, 1
    %v539 = vsel %vm189, %v538, %v537
    %v540 = vpack.c.b16 %v539, %v539
    %v542 = vsel %vm335, %v397, 0
    %vm544 = vcmask 1043456
    %v546 = vsel %vm544, %v540, 0
    %548 = vmatprep.subr.bf16.mxu0 0
    %549 = vmatpush1.bf16.msra.mxu0 %v546
    %550 = vmatprep.subr.bf16.mxu0 0
    %551 = vmatpush1.bf16.msra.mxu0 0
    %552 = vmatprep.subr.bf16.mxu0 0
    %553 = vmatpush1.bf16.msra.mxu0 0
    %554 = vmatprep.subr.bf16.mxu0 0
    %555 = vmatpush1.bf16.msra.mxu0 0
    %556 = vmatprep.subr.bf16.mxu0 0
    %557 = vmatpush1.bf16.msra.mxu0 0
    %558 = vmatprep.subr.bf16.mxu0 0
    %559 = vmatpush1.bf16.msra.mxu0 0
    %560 = vmatprep.subr.bf16.mxu0 0
    %561 = vmatpush1.bf16.msra.mxu0 0
    %562 = vmatprep.subr.bf16.mxu0 0
    %563 = vmatpush1.bf16.msra.mxu0 0
    %564 = vmatprep.subr.bf16.mxu0 0
    %565 = vmatpush1.bf16.msra.mxu0 0
    %566 = vmatprep.subr.bf16.mxu0 0
    %567 = vmatpush1.bf16.msra.mxu0 0
    %568 = vmatprep.subr.bf16.mxu0 0
    %569 = vmatpush1.bf16.msra.mxu0 0
    %570 = vmatprep.subr.bf16.mxu0 0
    %571 = vmatpush1.bf16.msra.mxu0 0
    %572 = vmatprep.subr.bf16.mxu0 0
    %573 = vmatpush1.bf16.msra.mxu0 0
    %574 = vmatprep.subr.bf16.mxu0 0
    %575 = vmatpush1.bf16.msra.mxu0 0
    %576 = vmatprep.subr.bf16.mxu0 0
    %577 = vmatpush1.bf16.msra.mxu0 0
    %578 = vmatprep.subr.bf16.mxu0 0
    %579 = vmatpush1.bf16.msra.mxu0 0
    %580 = vmatprep.mubr.bf16.mxu0 0
    %581 = vmatmul.mubr.bf16.gmra.mrb[0].mxu0 %v542
    %v582 = vpop.f32.mrb[0].mxu0
    %v583 = vadd.f32 0.0, %v582
    %v584 = vpop.f32.mrb[0].mxu0
    %v585 = vpop.f32.mrb[0].mxu0
    %v586 = vpop.f32.mrb[0].mxu0
    %587 = vdwg.mxu0
    %588 = vrot.lane.b32.xlu0 %v191, 120
    %v589 = vpop.permute.xlu0 %588
    %590 = vrot.lane.b32.xlu0 %v334, 120
    %v591 = vpop.permute.xlu0 %590
    %v593 = vsel %vm335, %v589, 0
    %v596 = vsel %vm335, %v591, 0
    %598 = vmatprep.subr.bf16.mxu0 0
    %599 = vmatpush1.bf16.xpose.msra.mxu0 %v596
    %600 = vmatprep.subr.bf16.mxu0 0
    %601 = vmatpush1.bf16.xpose.msra.mxu0 0
    %602 = vmatprep.subr.bf16.mxu0 0
    %603 = vmatpush1.bf16.xpose.msra.mxu0 0
    %604 = vmatprep.subr.bf16.mxu0 0
    %605 = vmatpush1.bf16.xpose.msra.mxu0 0
    %606 = vmatprep.subr.bf16.mxu0 0
    %607 = vmatpush1.bf16.xpose.msra.mxu0 0
    %608 = vmatprep.subr.bf16.mxu0 0
    %609 = vmatpush1.bf16.xpose.msra.mxu0 0
    %610 = vmatprep.subr.bf16.mxu0 0
    %611 = vmatpush1.bf16.xpose.msra.mxu0 0
    %612 = vmatprep.subr.bf16.mxu0 0
    %613 = vmatpush1.bf16.xpose.msra.mxu0 0
    %614 = vmatprep.subr.bf16.mxu0 0
    %615 = vmatpush1.bf16.xpose.msra.mxu0 0
    %616 = vmatprep.subr.bf16.mxu0 0
    %617 = vmatpush1.bf16.xpose.msra.mxu0 0
    %618 = vmatprep.subr.bf16.mxu0 0
    %619 = vmatpush1.bf16.xpose.msra.mxu0 0
    %620 = vmatprep.subr.bf16.mxu0 0
    %621 = vmatpush1.bf16.xpose.msra.mxu0 0
    %622 = vmatprep.subr.bf16.mxu0 0
    %623 = vmatpush1.bf16.xpose.msra.mxu0 0
    %624 = vmatprep.subr.bf16.mxu0 0
    %625 = vmatpush1.bf16.xpose.msra.mxu0 0
    %626 = vmatprep.subr.bf16.mxu0 0
    %627 = vmatpush1.bf16.xpose.msra.mxu0 0
    %628 = vmatprep.subr.bf16.mxu0 0
    %629 = vmatpush1.bf16.xpose.msra.mxu0 0
    %630 = vmatprep.mubr.bf16.mxu0 0
    %631 = vmatmul.mubr.bf16.gmra.mrb[0].mxu0 %v593
    %v632 = vpop.f32.mrb[0].mxu0
    %v633 = vadd.f32 0.0, %v632
    %v634 = vpop.f32.mrb[0].mxu0
    %v635 = vpop.f32.mrb[0].mxu0
    %v636 = vpop.f32.mrb[0].mxu0
    %637 = vdwg.mxu0
    %v638 = vsel %vm335, %v633, -inf
    %639 = vmax.xlane.f32.xlu0 %v638
    %v640 = vpop.xlane.xlu0 %639
    %v641 = vsub.f32 %v633, %v640
    %v642 = vmul.f32 %v641, 1.442695
    %v643 = vpow.pop %v642
    %v644 = vsel %vm335, %v643, 0.0
    %645 = vadd.xlane.f32.xlu0 %v644
    %v646 = vpop.xlane.xlu0 %645
    %v647 = vrcp.pop %v646
    %v648 = vmul.f32 %v646, %v647
    %v649 = vsub.f32 2.0, %v648
    %v650 = vmul.f32 %v647, %v649
    %v651 = vmul.f32 %v643, %v650
    %v652 = vadd.f32 %v396, %v651
    %v653 = vpack.c.bf16 %v651, %v651
    %654 = vrot.lane.b32.xlu0 %v540, 120
    %v655 = vpop.permute.xlu0 %654
    %v657 = vsel %vm335, %v653, 0
    %v660 = vsel %vm544, %v655, 0
    %662 = vmatprep.subr.bf16.mxu0 0
    %663 = vmatpush1.bf16.msra.mxu0 %v660
    %664 = vmatprep.subr.bf16.mxu0 0
    %665 = vmatpush1.bf16.msra.mxu0 0
    %666 = vmatprep.subr.bf16.mxu0 0
    %667 = vmatpush1.bf16.msra.mxu0 0
    %668 = vmatprep.subr.bf16.mxu0 0
    %669 = vmatpush1.bf16.msra.mxu0 0
    %670 = vmatprep.subr.bf16.mxu0 0
    %671 = vmatpush1.bf16.msra.mxu0 0
    %672 = vmatprep.subr.bf16.mxu0 0
    %673 = vmatpush1.bf16.msra.mxu0 0
    %674 = vmatprep.subr.bf16.mxu0 0
    %675 = vmatpush1.bf16.msra.mxu0 0
    %676 = vmatprep.subr.bf16.mxu0 0
    %677 = vmatpush1.bf16.msra.mxu0 0
    %678 = vmatprep.subr.bf16.mxu0 0
    %679 = vmatpush1.bf16.msra.mxu0 0
    %680 = vmatprep.subr.bf16.mxu0 0
    %681 = vmatpush1.bf16.msra.mxu0 0
    %682 = vmatprep.subr.bf16.mxu0 0
    %683 = vmatpush1.bf16.msra.mxu0 0
    %684 = vmatprep.subr.bf16.mxu0 0
    %685 = vmatpush1.bf16.msra.mxu0 0
    %686 = vmatprep.subr.bf16.mxu0 0
    %687 = vmatpush1.bf16.msra.mxu0 0
    %688 = vmatprep.subr.bf16.mxu0 0
    %689 = vmatpush1.bf16.msra.mxu0 0
    %690 = vmatprep.subr.bf16.mxu0 0
    %691 = vmatpush1.bf16.msra.mxu0 0
    %692 = vmatprep.subr.bf16.mxu0 0
    %693 = vmatpush1.bf16.msra.mxu0 0
    %694 = vmatprep.mubr.bf16.mxu0 0
    %695 = vmatmul.mubr.bf16.gmra.mrb[0].mxu0 %v657
    %v696 = vpop.f32.mrb[0].mxu0
    %v697 = vadd.f32 0.0, %v696
    %v698 = vpop.f32.mrb[0].mxu0
    %v699 = vpop.f32.mrb[0].mxu0
    %v700 = vpop.f32.mrb[0].mxu0
    %701 = vdwg.mxu0
    %702 = vrot.lane.b32.xlu0 %v191, 112
    %v703 = vpop.permute.xlu0 %702
    %704 = vrot.lane.b32.xlu0 %v334, 112
    %v705 = vpop.permute.xlu0 %704
    %v707 = vsel %vm335, %v703, 0
    %v710 = vsel %vm335, %v705, 0
    %712 = vmatprep.subr.bf16.mxu0 0
    %713 = vmatpush1.bf16.xpose.msra.mxu0 %v710
    %714 = vmatprep.subr.bf16.mxu0 0
    %715 = vmatpush1.bf16.xpose.msra.mxu0 0
    %716 = vmatprep.subr.bf16.mxu0 0
    %717 = vmatpush1.bf16.xpose.msra.mxu0 0
    %718 = vmatprep.subr.bf16.mxu0 0
    %719 = vmatpush1.bf16.xpose.msra.mxu0 0
    %720 = vmatprep.subr.bf16.mxu0 0
    %721 = vmatpush1.bf16.xpose.msra.mxu0 0
    %722 = vmatprep.subr.bf16.mxu0 0
    %723 = vmatpush1.bf16.xpose.msra.mxu0 0
    %724 = vmatprep.subr.bf16.mxu0 0
    %725 = vmatpush1.bf16.xpose.msra.mxu0 0
    %726 = vmatprep.subr.bf16.mxu0 0
    %727 = vmatpush1.bf16.xpose.msra.mxu0 0
    %728 = vmatprep.subr.bf16.mxu0 0
    %729 = vmatpush1.bf16.xpose.msra.mxu0 0
    %730 = vmatprep.subr.bf16.mxu0 0
    %731 = vmatpush1.bf16.xpose.msra.mxu0 0
    %732 = vmatprep.subr.bf16.mxu0 0
    %733 = vmatpush1.bf16.xpose.msra.mxu0 0
    %734 = vmatprep.subr.bf16.mxu0 0
    %735 = vmatpush1.bf16.xpose.msra.mxu0 0
    %736 = vmatprep.subr.bf16.mxu0 0
    %737 = vmatpush1.bf16.xpose.msra.mxu0 0
    %738 = vmatprep.subr.bf16.mxu0 0
    %739 = vmatpush1.bf16.xpose.msra.mxu0 0
    %740 = vmatprep.subr.bf16.mxu0 0
    %741 = vmatpush1.bf16.xpose.msra.mxu0 0
    %742 = vmatprep.subr.bf16.mxu0 0
    %743 = vmatpush1.bf16.xpose.msra.mxu0 0
    %744 = vmatprep.mubr.bf16.mxu0 0
    %745 = vmatmul.mubr.bf16.gmra.mrb[0].mxu0 %v707
    %v746 = vpop.f32.mrb[0].mxu0
    %v747 = vadd.f32 0.0, %v746
    %v748 = vpop.f32.mrb[0].mxu0
    %v749 = vpop.f32.mrb[0].mxu0
    %v750 = vpop.f32.mrb[0].mxu0
    %751 = vdwg.mxu0
    %v752 = vsel %vm335, %v747, -inf
    %753 = vmax.xlane.f32.xlu0 %v752
    %v754 = vpop.xlane.xlu0 %753
    %v755 = vsub.f32 %v747, %v754
    %v756 = vmul.f32 %v755, 1.442695
    %v757 = vpow.pop %v756
    %v758 = vsel %vm335, %v757, 0.0
    %759 = vadd.xlane.f32.xlu0 %v758
    %v760 = vpop.xlane.xlu0 %759
    %v761 = vrcp.pop %v760
    %v762 = vmul.f32 %v760, %v761
    %v763 = vsub.f32 2.0, %v762
    %v764 = vmul.f32 %v761, %v763
    %v765 = vmul.f32 %v757, %v764
    %v766 = vadd.f32 %v652, %v765
    %v767 = vpack.c.bf16 %v765, %v765
    %768 = vrot.lane.b32.xlu0 %v540, 112
    %v769 = vpop.permute.xlu0 %768
    %v771 = vsel %vm335, %v767, 0
    %v774 = vsel %vm544, %v769, 0
    %776 = vmatprep.subr.bf16.mxu0 0
    %777 = vmatpush1.bf16.msra.mxu0 %v774
    %778 = vmatprep.subr.bf16.mxu0 0
    %779 = vmatpush1.bf16.msra.mxu0 0
    %780 = vmatprep.subr.bf16.mxu0 0
    %781 = vmatpush1.bf16.msra.mxu0 0
    %782 = vmatprep.subr.bf16.mxu0 0
    %783 = vmatpush1.bf16.msra.mxu0 0
    %784 = vmatprep.subr.bf16.mxu0 0
    %785 = vmatpush1.bf16.msra.mxu0 0
    %786 = vmatprep.subr.bf16.mxu0 0
    %787 = vmatpush1.bf16.msra.mxu0 0
    %788 = vmatprep.subr.bf16.mxu0 0
    %789 = vmatpush1.bf16.msra.mxu0 0
    %790 = vmatprep.subr.bf16.mxu0 0
    %791 = vmatpush1.bf16.msra.mxu0 0
    %792 = vmatprep.subr.bf16.mxu0 0
    %793 = vmatpush1.bf16.msra.mxu0 0
    %794 = vmatprep.subr.bf16.mxu0 0
    %795 = vmatpush1.bf16.msra.mxu0 0
    %796 = vmatprep.subr.bf16.mxu0 0
    %797 = vmatpush1.bf16.msra.mxu0 0
    %798 = vmatprep.subr.bf16.mxu0 0
    %799 = vmatpush1.bf16.msra.mxu0 0
    %800 = vmatprep.subr.bf16.mxu0 0
    %801 = vmatpush1.bf16.msra.mxu0 0
    %802 = vmatprep.subr.bf16.mxu0 0
    %803 = vmatpush1.bf16.msra.mxu0 0
    %804 = vmatprep.subr.bf16.mxu0 0
    %805 = vmatpush1.bf16.msra.mxu0 0
    %806 = vmatprep.subr.bf16.mxu0 0
    %807 = vmatpush1.bf16.msra.mxu0 0
    %808 = vmatprep.mubr.bf16.mxu0 0
    %809 = vmatmul.mubr.bf16.gmra.mrb[0].mxu0 %v771
    %v810 = vpop.f32.mrb[0].mxu0
    %v811 = vadd.f32 0.0, %v810
    %v812 = vpop.f32.mrb[0].mxu0
    %v813 = vpop.f32.mrb[0].mxu0
    %v814 = vpop.f32.mrb[0].mxu0
    %815 = vdwg.mxu0
    %816 = vrot.lane.b32.xlu0 %v191, 104
    %v817 = vpop.permute.xlu0 %816
    %818 = vrot.lane.b32.xlu0 %v334, 104
    %v819 = vpop.permute.xlu0 %818
    %v821 = vsel %vm335, %v817, 0
    %v824 = vsel %vm335, %v819, 0
    %826 = vmatprep.subr.bf16.mxu0 0
    %827 = vmatpush1.bf16.xpose.msra.mxu0 %v824
    %828 = vmatprep.subr.bf16.mxu0 0
    %829 = vmatpush1.bf16.xpose.msra.mxu0 0
    %830 = vmatprep.subr.bf16.mxu0 0
    %831 = vmatpush1.bf16.xpose.msra.mxu0 0
    %832 = vmatprep.subr.bf16.mxu0 0
    %833 = vmatpush1.bf16.xpose.msra.mxu0 0
    %834 = vmatprep.subr.bf16.mxu0 0
    %835 = vmatpush1.bf16.xpose.msra.mxu0 0
    %836 = vmatprep.subr.bf16.mxu0 0
    %837 = vmatpush1.bf16.xpose.msra.mxu0 0
    %838 = vmatprep.subr.bf16.mxu0 0
    %839 = vmatpush1.bf16.xpose.msra.mxu0 0
    %840 = vmatprep.subr.bf16.mxu0 0
    %841 = vmatpush1.bf16.xpose.msra.mxu0 0
    %842 = vmatprep.subr.bf16.mxu0 0
    %843 = vmatpush1.bf16.xpose.msra.mxu0 0
    %844 = vmatprep.subr.bf16.mxu0 0
    %845 = vmatpush1.bf16.xpose.msra.mxu0 0
    %846 = vmatprep.subr.bf16.mxu0 0
    %847 = vmatpush1.bf16.xpose.msra.mxu0 0
    %848 = vmatprep.subr.bf16.mxu0 0
    %849 = vmatpush1.bf16.xpose.msra.mxu0 0
    %850 = vmatprep.subr.bf16.mxu0 0
    %851 = vmatpush1.bf16.xpose.msra.mxu0 0
    %852 = vmatprep.subr.bf16.mxu0 0
    %853 = vmatpush1.bf16.xpose.msra.mxu0 0
    %854 = vmatprep.subr.bf16.mxu0 0
    %855 = vmatpush1.bf16.xpose.msra.mxu0 0
    %856 = vmatprep.subr.bf16.mxu0 0
    %857 = vmatpush1.bf16.xpose.msra.mxu0 0
    %858 = vmatprep.mubr.bf16.mxu0 0
    %859 = vmatmul.mubr.bf16.gmra.mrb[0].mxu0 %v821
    %v860 = vpop.f32.mrb[0].mxu0
    %v861 = vadd.f32 0.0, %v860
    %v862 = vpop.f32.mrb[0].mxu0
    %v863 = vpop.f32.mrb[0].mxu0
    %v864 = vpop.f32.mrb[0].mxu0
    %865 = vdwg.mxu0
    %v866 = vsel %vm335, %v861, -inf
    %867 = vmax.xlane.f32.xlu0 %v866
    %v868 = vpop.xlane.xlu0 %867
    %v869 = vsub.f32 %v861, %v868
    %v870 = vmul.f32 %v869, 1.442695
    %v871 = vpow.pop %v870
    %v872 = vsel %vm335, %v871, 0.0
    %873 = vadd.xlane.f32.xlu0 %v872
    %v874 = vpop.xlane.xlu0 %873
    %v875 = vrcp.pop %v874
    %v876 = vmul.f32 %v874, %v875
    %v877 = vsub.f32 2.0, %v876
    %v878 = vmul.f32 %v875, %v877
    %v879 = vmul.f32 %v871, %v878
    %v880 = vadd.f32 %v766, %v879
    %v881 = vpack.c.bf16 %v879, %v879
    %882 = vrot.lane.b32.xlu0 %v540, 104
    %v883 = vpop.permute.xlu0 %882
    %v885 = vsel %vm335, %v881, 0
    %v888 = vsel %vm544, %v883, 0
    %890 = vmatprep.subr.bf16.mxu0 0
    %891 = vmatpush1.bf16.msra.mxu0 %v888
    %892 = vmatprep.subr.bf16.mxu0 0
    %893 = vmatpush1.bf16.msra.mxu0 0
    %894 = vmatprep.subr.bf16.mxu0 0
    %895 = vmatpush1.bf16.msra.mxu0 0
    %896 = vmatprep.subr.bf16.mxu0 0
    %897 = vmatpush1.bf16.msra.mxu0 0
    %898 = vmatprep.subr.bf16.mxu0 0
    %899 = vmatpush1.bf16.msra.mxu0 0
    %900 = vmatprep.subr.bf16.mxu0 0
    %901 = vmatpush1.bf16.msra.mxu0 0
    %902 = vmatprep.subr.bf16.mxu0 0
    %903 = vmatpush1.bf16.msra.mxu0 0
    %904 = vmatprep.subr.bf16.mxu0 0
    %905 = vmatpush1.bf16.msra.mxu0 0
    %906 = vmatprep.subr.bf16.mxu0 0
    %907 = vmatpush1.bf16.msra.mxu0 0
    %908 = vmatprep.subr.bf16.mxu0 0
    %909 = vmatpush1.bf16.msra.mxu0 0
    %910 = vmatprep.subr.bf16.mxu0 0
    %911 = vmatpush1.bf16.msra.mxu0 0
    %912 = vmatprep.subr.bf16.mxu0 0
    %913 = vmatpush1.bf16.msra.mxu0 0
    %914 = vmatprep.subr.bf16.mxu0 0
    %915 = vmatpush1.bf16.msra.mxu0 0
    %916 = vmatprep.subr.bf16.mxu0 0
    %917 = vmatpush1.bf16.msra.mxu0 0
    %918 = vmatprep.subr.bf16.mxu0 0
    %919 = vmatpush1.bf16.msra.mxu0 0
    %920 = vmatprep.subr.bf16.mxu0 0
    %921 = vmatpush1.bf16.msra.mxu0 0
    %922 = vmatprep.mubr.bf16.mxu0 0
    %923 = vmatmul.mubr.bf16.gmra.mrb[0].mxu0 %v885
    %v924 = vpop.f32.mrb[0].mxu0
    %v925 = vadd.f32 0.0, %v924
    %v926 = vpop.f32.mrb[0].mxu0
    %v927 = vpop.f32.mrb[0].mxu0
    %v928 = vpop.f32.mrb[0].mxu0
    %929 = vdwg.mxu0
    %931 = vrot.lane.b32.xlu0 %v697, 8
    %v932 = vpop.permute.xlu0 %931
    %935 = vrot.lane.b32.xlu0 %v811, 16
    %v936 = vpop.permute.xlu0 %935
    %939 = vrot.lane.b32.xlu0 %v925, 24
    %v940 = vpop.permute.xlu0 %939
    %v942 = vsel %vm335, %v583, %v932
    %vm943 = vcmask 130048
    %v944 = vsel %vm943, %v942, %v936
    %vm945 = vcmask 195584
    %v946 = vsel %vm945, %v944, %v940
    %v947 = vpack.c.bf16 %v946, %v946
    %v950 = vunpack.c.l.s4 1966171168
    %v951 = vunpack.c.0.s8 %v950
    %v952 = vlaneseq
    %v953 = vshrl.u32 %v952, 7
    %v954 = vsub.s32 %v951, %v953
    %v955 = vrot.slane %v947, %v954
    %v956 = vcombine.high %v955, %v955
    %v958 = vunpack.c.l.s4 1966171168
    %v959 = vunpack.c.0.s8 %v958
    %v960 = vlaneseq
    %v961 = vshrl.u32 %v960, 7
    %v962 = vsub.s32 %v959, %v961
    %v963 = vrot.slane %v955, %v962
    %v965 = vunpack.c.l.s4 1966171168
    %v966 = vunpack.c.0.s8 %v965
    %v967 = vlaneseq
    %v968 = vshrl.u32 %v967, 7
    %v969 = vsub.s32 %v966, %v968
    %v970 = vrot.slane %v956, %v969
    %v971 = vcombine.high %v963, %v963
    %v972 = vcombine.high %v970, %v970
    %v973 = vunpack.i.l.s16 %v963
    %v974 = vunpack.i.h.s16 %v963
    %v975 = vunpack.i.l.s16 %v970
    %v976 = vunpack.i.h.s16 %v970
    %v977 = vunpack.i.l.s16 %v971
    %v978 = vunpack.i.h.s16 %v971
    %v979 = vunpack.i.l.s16 %v972
    %v980 = vunpack.i.h.s16 %v972
    %v981 = vpack.i.b16 %v973, %v973
    %v982 = vpack.i.b16 %v974, %v974
    %v983 = vpack.i.b16 %v975, %v975
    %v984 = vpack.i.b16 %v976, %v976
    %v985 = vpack.i.b16 %v977, %v977
    %v986 = vpack.i.b16 %v978, %v978
    %v987 = vpack.i.b16 %v979, %v979
    %v988 = vpack.i.b16 %v980, %v980
    %vm997 = vcmask 253952
    %vm998 = vsmask.f32 256
    %vm999 = vmand %vm997, %vm998
    %v1000 = vld [vmem:[%s3] sm:$0x1]
    %v1001 = vsel %vm999, %v981, %v1000
    %1002 = vst [vmem:[%s3] sm:$0x1] %v1001
    %v1003 = vld [vmem:[%s3 + $0x1] sm:$0x1]
    %v1004 = vsel %vm999, %v982, %v1003
    %1005 = vst [vmem:[%s3 + $0x1] sm:$0x1] %v1004
    %v1006 = vld [vmem:[%s3 + $0x2] sm:$0x1]
    %v1007 = vsel %vm999, %v983, %v1006
    %1008 = vst [vmem:[%s3 + $0x2] sm:$0x1] %v1007
    %v1009 = vld [vmem:[%s3 + $0x3] sm:$0x1]
    %v1010 = vsel %vm999, %v984, %v1009
    %1011 = vst [vmem:[%s3 + $0x3] sm:$0x1] %v1010
    %v1012 = vld [vmem:[%s3 + $0x4] sm:$0x1]
    %v1013 = vsel %vm999, %v985, %v1012
    %1014 = vst [vmem:[%s3 + $0x4] sm:$0x1] %v1013
    %v1015 = vld [vmem:[%s3 + $0x5] sm:$0x1]
    %v1016 = vsel %vm999, %v986, %v1015
    %1017 = vst [vmem:[%s3 + $0x5] sm:$0x1] %v1016
    %v1018 = vld [vmem:[%s3 + $0x6] sm:$0x1]
    %v1019 = vsel %vm999, %v987, %v1018
    %1020 = vst [vmem:[%s3 + $0x6] sm:$0x1] %v1019
    %v1021 = vld [vmem:[%s3 + $0x7] sm:$0x1]
    %v1022 = vsel %vm999, %v988, %v1021
    %1023 = vst [vmem:[%s3 + $0x7] sm:$0x1] %v1022
    %v1024 = vmul.f32 %v880, 0.25
    %1025 = vst.msk [vmem:[#allocation2] sm:$0xff] %vm335, %v1024
    %v1026 = vrot.slane %v162, 1
    %v1027 = vsel %vm171, %v163, %v1026
    %v1028 = vrot.slane %v164, 7
    %v1029 = vsel %vm174, %v1028, %v1027
    %v1030 = vrot.slane %v165, 6
    %v1031 = vsel %vm177, %v1030, %v1029
    %v1032 = vrot.slane %v166, 5
    %v1033 = vsel %vm180, %v1032, %v1031
    %v1034 = vrot.slane %v167, 4
    %v1035 = vsel %vm183, %v1034, %v1033
    %v1036 = vrot.slane %v168, 3
    %v1037 = vsel %vm186, %v1036, %v1035
    %v1038 = vrot.slane %v169, 2
    %v1039 = vsel %vm189, %v1038, %v1037
    %v1040 = vpack.c.b16 %v1039, %v1039
    %v1041 = vrot.slane %v312, 1
    %v1042 = vsel %vm171, %v313, %v1041
    %v1043 = vrot.slane %v314, 7
    %v1044 = vsel %vm174, %v1043, %v1042
    %v1045 = vrot.slane %v315, 6
    %v1046 = vsel %vm177, %v1045, %v1044
    %v1047 = vrot.slane %v316, 5
    %v1048 = vsel %vm180, %v1047, %v1046
    %v1049 = vrot.slane %v317, 4
    %v1050 = vsel %vm183, %v1049, %v1048
    %v1051 = vrot.slane %v318, 3
    %v1052 = vsel %vm186, %v1051, %v1050
    %v1053 = vrot.slane %v319, 2
    %v1054 = vsel %vm189, %v1053, %v1052
    %v1055 = vpack.c.b16 %v1054, %v1054
    %v1057 = vsel %vm335, %v1040, 0
    %v1060 = vsel %vm335, %v1055, 0
    %1062 = vmatprep.subr.bf16.mxu0 0
    %1063 = vmatpush1.bf16.xpose.msra.mxu0 %v1060
    %1064 = vmatprep.subr.bf16.mxu0 0
    %1065 = vmatpush1.bf16.xpose.msra.mxu0 0
    %1066 = vmatprep.subr.bf16.mxu0 0
    %1067 = vmatpush1.bf16.xpose.msra.mxu0 0
    %1068 = vmatprep.subr.bf16.mxu0 0
    %1069 = vmatpush1.bf16.xpose.msra.mxu0 0
    %1070 = vmatprep.subr.bf16.mxu0 0
    %1071 = vmatpush1.bf16.xpose.msra.mxu0 0
    %1072 = vmatprep.subr.bf16.mxu0 0
    %1073 = vmatpush1.bf16.xpose.msra.mxu0 0
    %1074 = vmatprep.subr.bf16.mxu0 0
    %1075 = vmatpush1.bf16.xpose.msra.mxu0 0
    %1076 = vmatprep.subr.bf16.mxu0 0
    %1077 = vmatpush1.bf16.xpose.msra.mxu0 0
    %1078 = vmatprep.subr.bf16.mxu0 0
    %1079 = vmatpush1.bf16.xpose.msra.mxu0 0
    %1080 = vmatprep.subr.bf16.mxu0 0
    %1081 = vmatpush1.bf16.xpose.msra.mxu0 0
    %1082 = vmatprep.subr.bf16.mxu0 0
    %1083 = vmatpush1.bf16.xpose.msra.mxu0 0
    %1084 = vmatprep.subr.bf16.mxu0 0
    %1085 = vmatpush1.bf16.xpose.msra.mxu0 0
    %1086 = vmatprep.subr.bf16.mxu0 0
    %1087 = vmatpush1.bf16.xpose.msra.mxu0 0
    %1088 = vmatprep.subr.bf16.mxu0 0
    %1089 = vmatpush1.bf16.xpose.msra.mxu0 0
    %1090 = vmatprep.subr.bf16.mxu0 0
    %1091 = vmatpush1.bf16.xpose.msra.mxu0 0
    %1092 = vmatprep.subr.bf16.mxu0 0
    %1093 = vmatpush1.bf16.xpose.msra.mxu0 0
    %1094 = vmatprep.mubr.bf16.mxu0 0
    %1095 = vmatmul.mubr.bf16.gmra.mrb[0].mxu0 %v1057
    %v1096 = vpop.f32.mrb[0].mxu0
    %v1097 = vadd.f32 0.0, %v1096
    %v1098 = vpop.f32.mrb[0].mxu0
    %v1099 = vpop.f32.mrb[0].mxu0
    %v1100 = vpop.f32.mrb[0].mxu0
    %1101 = vdwg.mxu0
    %v1102 = vsel %vm335, %v1097, -inf
    %1103 = vmax.xlane.f32.xlu0 %v1102
    %v1104 = vpop.xlane.xlu0 %1103
    %v1105 = vsub.f32 %v1097, %v1104
    %v1106 = vmul.f32 %v1105, 1.442695
    %v1107 = vpow.pop %v1106
    %v1108 = vsel %vm335, %v1107, 0.0
    %1109 = vadd.xlane.f32.xlu0 %v1108
    %v1110 = vpop.xlane.xlu0 %1109
    %v1111 = vrcp.pop %v1110
    %v1112 = vmul.f32 %v1110, %v1111
    %v1113 = vsub.f32 2.0, %v1112
    %v1114 = vmul.f32 %v1111, %v1113
    %v1115 = vmul.f32 %v1107, %v1114
    %v1116 = vadd.f32 %v1115, 0.0
    %v1117 = vpack.c.bf16 %v1115, %v1115
    %v1118 = vrot.slane %v518, 1
    %v1119 = vsel %vm171, %v519, %v1118
    %v1120 = vrot.slane %v520, 7
    %v1121 = vsel %vm174, %v1120, %v1119
    %v1122 = vrot.slane %v521, 6
    %v1123 = vsel %vm177, %v1122, %v1121
    %v1124 = vrot.slane %v522, 5
    %v1125 = vsel %vm180, %v1124, %v1123
    %v1126 = vrot.slane %v523, 4
    %v1127 = vsel %vm183, %v1126, %v1125
    %v1128 = vrot.slane %v524, 3
    %v1129 = vsel %vm186, %v1128, %v1127
    %v1130 = vrot.slane %v525, 2
    %v1131 = vsel %vm189, %v1130, %v1129
    %v1132 = vpack.c.b16 %v1131, %v1131
    %v1134 = vsel %vm335, %v1117, 0
    %v1137 = vsel %vm544, %v1132, 0
    %1139 = vmatprep.subr.bf16.mxu0 0
    %1140 = vmatpush1.bf16.msra.mxu0 %v1137
    %1141 = vmatprep.subr.bf16.mxu0 0
    %1142 = vmatpush1.bf16.msra.mxu0 0
    %1143 = vmatprep.subr.bf16.mxu0 0
    %1144 = vmatpush1.bf16.msra.mxu0 0
    %1145 = vmatprep.subr.bf16.mxu0 0
    %1146 = vmatpush1.bf16.msra.mxu0 0
    %1147 = vmatprep.subr.bf16.mxu0 0
    %1148 = vmatpush1.bf16.msra.mxu0 0
    %1149 = vmatprep.subr.bf16.mxu0 0
    %1150 = vmatpush1.bf16.msra.mxu0 0
    %1151 = vmatprep.subr.bf16.mxu0 0
    %1152 = vmatpush1.bf16.msra.mxu0 0
    %1153 = vmatprep.subr.bf16.mxu0 0
    %1154 = vmatpush1.bf16.msra.mxu0 0
    %1155 = vmatprep.subr.bf16.mxu0 0
    %1156 = vmatpush1.bf16.msra.mxu0 0
    %1157 = vmatprep.subr.bf16.mxu0 0
    %1158 = vmatpush1.bf16.msra.mxu0 0
    %1159 = vmatprep.subr.bf16.mxu0 0
    %1160 = vmatpush1.bf16.msra.mxu0 0
    %1161 = vmatprep.subr.bf16.mxu0 0
    %1162 = vmatpush1.bf16.msra.mxu0 0
    %1163 = vmatprep.subr.bf16.mxu0 0
    %1164 = vmatpush1.bf16.msra.mxu0 0
    %1165 = vmatprep.subr.bf16.mxu0 0
    %1166 = vmatpush1.bf16.msra.mxu0 0
    %1167 = vmatprep.subr.bf16.mxu0 0
    %1168 = vmatpush1.bf16.msra.mxu0 0
    %1169 = vmatprep.subr.bf16.mxu0 0
    %1170 = vmatpush1.bf16.msra.mxu0 0
    %1171 = vmatprep.mubr.bf16.mxu0 0
    %1172 = vmatmul.mubr.bf16.gmra.mrb[0].mxu0 %v1134
    %v1173 = vpop.f32.mrb[0].mxu0
    %v1174 = vadd.f32 0.0, %v1173
    %v1175 = vpop.f32.mrb[0].mxu0
    %v1176 = vpop.f32.mrb[0].mxu0
    %v1177 = vpop.f32.mrb[0].mxu0
    %1178 = vdwg.mxu0
    %1179 = vrot.lane.b32.xlu0 %v1040, 120
    %v1180 = vpop.permute.xlu0 %1179
    %1181 = vrot.lane.b32.xlu0 %v1055, 120
    %v1182 = vpop.permute.xlu0 %1181
    %v1184 = vsel %vm335, %v1180, 0
    %v1187 = vsel %vm335, %v1182, 0
    %1189 = vmatprep.subr.bf16.mxu0 0
    %1190 = vmatpush1.bf16.xpose.msra.mxu0 %v1187
    %1191 = vmatprep.subr.bf16.mxu0 0
    %1192 = vmatpush1.bf16.xpose.msra.mxu0 0
    %1193 = vmatprep.subr.bf16.mxu0 0
    %1194 = vmatpush1.bf16.xpose.msra.mxu0 0
    %1195 = vmatprep.subr.bf16.mxu0 0
    %1196 = vmatpush1.bf16.xpose.msra.mxu0 0
    %1197 = vmatprep.subr.bf16.mxu0 0
    %1198 = vmatpush1.bf16.xpose.msra.mxu0 0
    %1199 = vmatprep.subr.bf16.mxu0 0
    %1200 = vmatpush1.bf16.xpose.msra.mxu0 0
    %1201 = vmatprep.subr.bf16.mxu0 0
    %1202 = vmatpush1.bf16.xpose.msra.mxu0 0
    %1203 = vmatprep.subr.bf16.mxu0 0
    %1204 = vmatpush1.bf16.xpose.msra.mxu0 0
    %1205 = vmatprep.subr.bf16.mxu0 0
    %1206 = vmatpush1.bf16.xpose.msra.mxu0 0
    %1207 = vmatprep.subr.bf16.mxu0 0
    %1208 = vmatpush1.bf16.xpose.msra.mxu0 0
    %1209 = vmatprep.subr.bf16.mxu0 0
    %1210 = vmatpush1.bf16.xpose.msra.mxu0 0
    %1211 = vmatprep.subr.bf16.mxu0 0
    %1212 = vmatpush1.bf16.xpose.msra.mxu0 0
    %1213 = vmatprep.subr.bf16.mxu0 0
    %1214 = vmatpush1.bf16.xpose.msra.mxu0 0
    %1215 = vmatprep.subr.bf16.mxu0 0
    %1216 = vmatpush1.bf16.xpose.msra.mxu0 0
    %1217 = vmatprep.subr.bf16.mxu0 0
    %1218 = vmatpush1.bf16.xpose.msra.mxu0 0
    %1219 = vmatprep.subr.bf16.mxu0 0
    %1220 = vmatpush1.bf16.xpose.msra.mxu0 0
    %1221 = vmatprep.mubr.bf16.mxu0 0
    %1222 = vmatmul.mubr.bf16.gmra.mrb[0].mxu0 %v1184
    %v1223 = vpop.f32.mrb[0].mxu0
    %v1224 = vadd.f32 0.0, %v1223
    %v1225 = vpop.f32.mrb[0].mxu0
    %v1226 = vpop.f32.mrb[0].mxu0
    %v1227 = vpop.f32.mrb[0].mxu0
    %1228 = vdwg.mxu0
    %v1229 = vsel %vm335, %v1224, -inf
    %1230 = vmax.xlane.f32.xlu0 %v1229
    %v1231 = vpop.xlane.xlu0 %1230
    %v1232 = vsub.f32 %v1224, %v1231
    %v1233 = vmul.f32 %v1232, 1.442695
    %v1234 = vpow.pop %v1233
    %v1235 = vsel %vm335, %v1234, 0.0
    %1236 = vadd.xlane.f32.xlu0 %v1235
    %v1237 = vpop.xlane.xlu0 %1236
    %v1238 = vrcp.pop %v1237
    %v1239 = vmul.f32 %v1237, %v1238
    %v1240 = vsub.f32 2.0, %v1239
    %v1241 = vmul.f32 %v1238, %v1240
    %v1242 = vmul.f32 %v1234, %v1241
    %v1243 = vadd.f32 %v1116, %v1242
    %v1244 = vpack.c.bf16 %v1242, %v1242
    %1245 = vrot.lane.b32.xlu0 %v1132, 120
    %v1246 = vpop.permute.xlu0 %1245
    %v1248 = vsel %vm335, %v1244, 0
    %v1251 = vsel %vm544, %v1246, 0
    %1253 = vmatprep.subr.bf16.mxu0 0
    %1254 = vmatpush1.bf16.msra.mxu0 %v1251
    %1255 = vmatprep.subr.bf16.mxu0 0
    %1256 = vmatpush1.bf16.msra.mxu0 0
    %1257 = vmatprep.subr.bf16.mxu0 0
    %1258 = vmatpush1.bf16.msra.mxu0 0
    %1259 = vmatprep.subr.bf16.mxu0 0
    %1260 = vmatpush1.bf16.msra.mxu0 0
    %1261 = vmatprep.subr.bf16.mxu0 0
    %1262 = vmatpush1.bf16.msra.mxu0 0
    %1263 = vmatprep.subr.bf16.mxu0 0
    %1264 = vmatpush1.bf16.msra.mxu0 0
    %1265 = vmatprep.subr.bf16.mxu0 0
    %1266 = vmatpush1.bf16.msra.mxu0 0
    %1267 = vmatprep.subr.bf16.mxu0 0
    %1268 = vmatpush1.bf16.msra.mxu0 0
    %1269 = vmatprep.subr.bf16.mxu0 0
    %1270 = vmatpush1.bf16.msra.mxu0 0
    %1271 = vmatprep.subr.bf16.mxu0 0
    %1272 = vmatpush1.bf16.msra.mxu0 0
    %1273 = vmatprep.subr.bf16.mxu0 0
    %1274 = vmatpush1.bf16.msra.mxu0 0
    %1275 = vmatprep.subr.bf16.mxu0 0
    %1276 = vmatpush1.bf16.msra.mxu0 0
    %1277 = vmatprep.subr.bf16.mxu0 0
    %1278 = vmatpush1.bf16.msra.mxu0 0
    %1279 = vmatprep.subr.bf16.mxu0 0
    %1280 = vmatpush1.bf16.msra.mxu0 0
    %1281 = vmatprep.subr.bf16.mxu0 0
    %1282 = vmatpush1.bf16.msra.mxu0 0
    %1283 = vmatprep.subr.bf16.mxu0 0
    %1284 = vmatpush1.bf16.msra.mxu0 0
    %1285 = vmatprep.mubr.bf16.mxu0 0
    %1286 = vmatmul.mubr.bf16.gmra.mrb[0].mxu0 %v1248
    %v1287 = vpop.f32.mrb[0].mxu0
    %v1288 = vadd.f32 0.0, %v1287
    %v1289 = vpop.f32.mrb[0].mxu0
    %v1290 = vpop.f32.mrb[0].mxu0
    %v1291 = vpop.f32.mrb[0].mxu0
    %1292 = vdwg.mxu0
    %1293 = vrot.lane.b32.xlu0 %v1040, 112
    %v1294 = vpop.permute.xlu0 %1293
    %1295 = vrot.lane.b32.xlu0 %v1055, 112
    %v1296 = vpop.permute.xlu0 %1295
    %v1298 = vsel %vm335, %v1294, 0
    %v1301 = vsel %vm335, %v1296, 0
    %1303 = vmatprep.subr.bf16.mxu0 0
    %1304 = vmatpush1.bf16.xpose.msra.mxu0 %v1301
    %1305 = vmatprep.subr.bf16.mxu0 0
    %1306 = vmatpush1.bf16.xpose.msra.mxu0 0
    %1307 = vmatprep.subr.bf16.mxu0 0
    %1308 = vmatpush1.bf16.xpose.msra.mxu0 0
    %1309 = vmatprep.subr.bf16.mxu0 0
    %1310 = vmatpush1.bf16.xpose.msra.mxu0 0
    %1311 = vmatprep.subr.bf16.mxu0 0
    %1312 = vmatpush1.bf16.xpose.msra.mxu0 0
    %1313 = vmatprep.subr.bf16.mxu0 0
    %1314 = vmatpush1.bf16.xpose.msra.mxu0 0
    %1315 = vmatprep.subr.bf16.mxu0 0
    %1316 = vmatpush1.bf16.xpose.msra.mxu0 0
    %1317 = vmatprep.subr.bf16.mxu0 0
    %1318 = vmatpush1.bf16.xpose.msra.mxu0 0
    %1319 = vmatprep.subr.bf16.mxu0 0
    %1320 = vmatpush1.bf16.xpose.msra.mxu0 0
    %1321 = vmatprep.subr.bf16.mxu0 0
    %1322 = vmatpush1.bf16.xpose.msra.mxu0 0
    %1323 = vmatprep.subr.bf16.mxu0 0
    %1324 = vmatpush1.bf16.xpose.msra.mxu0 0
    %1325 = vmatprep.subr.bf16.mxu0 0
    %1326 = vmatpush1.bf16.xpose.msra.mxu0 0
    %1327 = vmatprep.subr.bf16.mxu0 0
    %1328 = vmatpush1.bf16.xpose.msra.mxu0 0
    %1329 = vmatprep.subr.bf16.mxu0 0
    %1330 = vmatpush1.bf16.xpose.msra.mxu0 0
    %1331 = vmatprep.subr.bf16.mxu0 0
    %1332 = vmatpush1.bf16.xpose.msra.mxu0 0
    %1333 = vmatprep.subr.bf16.mxu0 0
    %1334 = vmatpush1.bf16.xpose.msra.mxu0 0
    %1335 = vmatprep.mubr.bf16.mxu0 0
    %1336 = vmatmul.mubr.bf16.gmra.mrb[0].mxu0 %v1298
    %v1337 = vpop.f32.mrb[0].mxu0
    %v1338 = vadd.f32 0.0, %v1337
    %v1339 = vpop.f32.mrb[0].mxu0
    %v1340 = vpop.f32.mrb[0].mxu0
    %v1341 = vpop.f32.mrb[0].mxu0
    %1342 = vdwg.mxu0
    %v1343 = vsel %vm335, %v1338, -inf
    %1344 = vmax.xlane.f32.xlu0 %v1343
    %v1345 = vpop.xlane.xlu0 %1344
    %v1346 = vsub.f32 %v1338, %v1345
    %v1347 = vmul.f32 %v1346, 1.442695
    %v1348 = vpow.pop %v1347
    %v1349 = vsel %vm335, %v1348, 0.0
    %1350 = vadd.xlane.f32.xlu0 %v1349
    %v1351 = vpop.xlane.xlu0 %1350
    %v1352 = vrcp.pop %v1351
    %v1353 = vmul.f32 %v1351, %v1352
    %v1354 = vsub.f32 2.0, %v1353
    %v1355 = vmul.f32 %v1352, %v1354
    %v1356 = vmul.f32 %v1348, %v1355
    %v1357 = vadd.f32 %v1243, %v1356
    %v1358 = vpack.c.bf16 %v1356, %v1356
    %1359 = vrot.lane.b32.xlu0 %v1132, 112
    %v1360 = vpop.permute.xlu0 %1359
    %v1362 = vsel %vm335, %v1358, 0
    %v1365 = vsel %vm544, %v1360, 0
    %1367 = vmatprep.subr.bf16.mxu0 0
    %1368 = vmatpush1.bf16.msra.mxu0 %v1365
    %1369 = vmatprep.subr.bf16.mxu0 0
    %1370 = vmatpush1.bf16.msra.mxu0 0
    %1371 = vmatprep.subr.bf16.mxu0 0
    %1372 = vmatpush1.bf16.msra.mxu0 0
    %1373 = vmatprep.subr.bf16.mxu0 0
    %1374 = vmatpush1.bf16.msra.mxu0 0
    %1375 = vmatprep.subr.bf16.mxu0 0
    %1376 = vmatpush1.bf16.msra.mxu0 0
    %1377 = vmatprep.subr.bf16.mxu0 0
    %1378 = vmatpush1.bf16.msra.mxu0 0
    %1379 = vmatprep.subr.bf16.mxu0 0
    %1380 = vmatpush1.bf16.msra.mxu0 0
    %1381 = vmatprep.subr.bf16.mxu0 0
    %1382 = vmatpush1.bf16.msra.mxu0 0
    %1383 = vmatprep.subr.bf16.mxu0 0
    %1384 = vmatpush1.bf16.msra.mxu0 0
    %1385 = vmatprep.subr.bf16.mxu0 0
    %1386 = vmatpush1.bf16.msra.mxu0 0
    %1387 = vmatprep.subr.bf16.mxu0 0
    %1388 = vmatpush1.bf16.msra.mxu0 0
    %1389 = vmatprep.subr.bf16.mxu0 0
    %1390 = vmatpush1.bf16.msra.mxu0 0
    %1391 = vmatprep.subr.bf16.mxu0 0
    %1392 = vmatpush1.bf16.msra.mxu0 0
    %1393 = vmatprep.subr.bf16.mxu0 0
    %1394 = vmatpush1.bf16.msra.mxu0 0
    %1395 = vmatprep.subr.bf16.mxu0 0
    %1396 = vmatpush1.bf16.msra.mxu0 0
    %1397 = vmatprep.subr.bf16.mxu0 0
    %1398 = vmatpush1.bf16.msra.mxu0 0
    %1399 = vmatprep.mubr.bf16.mxu0 0
    %1400 = vmatmul.mubr.bf16.gmra.mrb[0].mxu0 %v1362
    %v1401 = vpop.f32.mrb[0].mxu0
    %v1402 = vadd.f32 0.0, %v1401
    %v1403 = vpop.f32.mrb[0].mxu0
    %v1404 = vpop.f32.mrb[0].mxu0
    %v1405 = vpop.f32.mrb[0].mxu0
    %1406 = vdwg.mxu0
    %1407 = vrot.lane.b32.xlu0 %v1040, 104
    %v1408 = vpop.permute.xlu0 %1407
    %1409 = vrot.lane.b32.xlu0 %v1055, 104
    %v1410 = vpop.permute.xlu0 %1409
    %v1412 = vsel %vm335, %v1408, 0
    %v1415 = vsel %vm335, %v1410, 0
    %1417 = vmatprep.subr.bf16.mxu0 0
    %1418 = vmatpush1.bf16.xpose.msra.mxu0 %v1415
    %1419 = vmatprep.subr.bf16.mxu0 0
    %1420 = vmatpush1.bf16.xpose.msra.mxu0 0
    %1421 = vmatprep.subr.bf16.mxu0 0
    %1422 = vmatpush1.bf16.xpose.msra.mxu0 0
    %1423 = vmatprep.subr.bf16.mxu0 0
    %1424 = vmatpush1.bf16.xpose.msra.mxu0 0
    %1425 = vmatprep.subr.bf16.mxu0 0
    %1426 = vmatpush1.bf16.xpose.msra.mxu0 0
    %1427 = vmatprep.subr.bf16.mxu0 0
    %1428 = vmatpush1.bf16.xpose.msra.mxu0 0
    %1429 = vmatprep.subr.bf16.mxu0 0
    %1430 = vmatpush1.bf16.xpose.msra.mxu0 0
    %1431 = vmatprep.subr.bf16.mxu0 0
    %1432 = vmatpush1.bf16.xpose.msra.mxu0 0
    %1433 = vmatprep.subr.bf16.mxu0 0
    %1434 = vmatpush1.bf16.xpose.msra.mxu0 0
    %1435 = vmatprep.subr.bf16.mxu0 0
    %1436 = vmatpush1.bf16.xpose.msra.mxu0 0
    %1437 = vmatprep.subr.bf16.mxu0 0
    %1438 = vmatpush1.bf16.xpose.msra.mxu0 0
    %1439 = vmatprep.subr.bf16.mxu0 0
    %1440 = vmatpush1.bf16.xpose.msra.mxu0 0
    %1441 = vmatprep.subr.bf16.mxu0 0
    %1442 = vmatpush1.bf16.xpose.msra.mxu0 0
    %1443 = vmatprep.subr.bf16.mxu0 0
    %1444 = vmatpush1.bf16.xpose.msra.mxu0 0
    %1445 = vmatprep.subr.bf16.mxu0 0
    %1446 = vmatpush1.bf16.xpose.msra.mxu0 0
    %1447 = vmatprep.subr.bf16.mxu0 0
    %1448 = vmatpush1.bf16.xpose.msra.mxu0 0
    %1449 = vmatprep.mubr.bf16.mxu0 0
    %1450 = vmatmul.mubr.bf16.gmra.mrb[0].mxu0 %v1412
    %v1451 = vpop.f32.mrb[0].mxu0
    %v1452 = vadd.f32 0.0, %v1451
    %v1453 = vpop.f32.mrb[0].mxu0
    %v1454 = vpop.f32.mrb[0].mxu0
    %v1455 = vpop.f32.mrb[0].mxu0
    %1456 = vdwg.mxu0
    %v1457 = vsel %vm335, %v1452, -inf
    %1458 = vmax.xlane.f32.xlu0 %v1457
    %v1459 = vpop.xlane.xlu0 %1458
    %v1460 = vsub.f32 %v1452, %v1459
    %v1461 = vmul.f32 %v1460, 1.442695
    %v1462 = vpow.pop %v1461
    %v1463 = vsel %vm335, %v1462, 0.0
    %1464 = vadd.xlane.f32.xlu0 %v1463
    %v1465 = vpop.xlane.xlu0 %1464
    %v1466 = vrcp.pop %v1465
    %v1467 = vmul.f32 %v1465, %v1466
    %v1468 = vsub.f32 2.0, %v1467
    %v1469 = vmul.f32 %v1466, %v1468
    %v1470 = vmul.f32 %v1462, %v1469
    %v1471 = vadd.f32 %v1357, %v1470
    %v1472 = vpack.c.bf16 %v1470, %v1470
    %1473 = vrot.lane.b32.xlu0 %v1132, 104
    %v1474 = vpop.permute.xlu0 %1473
    %v1476 = vsel %vm335, %v1472, 0
    %v1479 = vsel %vm544, %v1474, 0
    %1481 = vmatprep.subr.bf16.mxu0 0
    %1482 = vmatpush1.bf16.msra.mxu0 %v1479
    %1483 = vmatprep.subr.bf16.mxu0 0
    %1484 = vmatpush1.bf16.msra.mxu0 0
    %1485 = vmatprep.subr.bf16.mxu0 0
    %1486 = vmatpush1.bf16.msra.mxu0 0
    %1487 = vmatprep.subr.bf16.mxu0 0
    %1488 = vmatpush1.bf16.msra.mxu0 0
    %1489 = vmatprep.subr.bf16.mxu0 0
    %1490 = vmatpush1.bf16.msra.mxu0 0
    %1491 = vmatprep.subr.bf16.mxu0 0
    %1492 = vmatpush1.bf16.msra.mxu0 0
    %1493 = vmatprep.subr.bf16.mxu0 0
    %1494 = vmatpush1.bf16.msra.mxu0 0
    %1495 = vmatprep.subr.bf16.mxu0 0
    %1496 = vmatpush1.bf16.msra.mxu0 0
    %1497 = vmatprep.subr.bf16.mxu0 0
    %1498 = vmatpush1.bf16.msra.mxu0 0
    %1499 = vmatprep.subr.bf16.mxu0 0
    %1500 = vmatpush1.bf16.msra.mxu0 0
    %1501 = vmatprep.subr.bf16.mxu0 0
    %1502 = vmatpush1.bf16.msra.mxu0 0
    %1503 = vmatprep.subr.bf16.mxu0 0
    %1504 = vmatpush1.bf16.msra.mxu0 0
    %1505 = vmatprep.subr.bf16.mxu0 0
    %1506 = vmatpush1.bf16.msra.mxu0 0
    %1507 = vmatprep.subr.bf16.mxu0 0
    %1508 = vmatpush1.bf16.msra.mxu0 0
    %1509 = vmatprep.subr.bf16.mxu0 0
    %1510 = vmatpush1.bf16.msra.mxu0 0
    %1511 = vmatprep.subr.bf16.mxu0 0
    %1512 = vmatpush1.bf16.msra.mxu0 0
    %1513 = vmatprep.mubr.bf16.mxu0 0
    %1514 = vmatmul.mubr.bf16.gmra.mrb[0].mxu0 %v1476
    %v1515 = vpop.f32.mrb[0].mxu0
    %v1516 = vadd.f32 0.0, %v1515
    %v1517 = vpop.f32.mrb[0].mxu0
    %v1518 = vpop.f32.mrb[0].mxu0
    %v1519 = vpop.f32.mrb[0].mxu0
    %1520 = vdwg.mxu0
    %1522 = vrot.lane.b32.xlu0 %v1288, 8
    %v1523 = vpop.permute.xlu0 %1522
    %1526 = vrot.lane.b32.xlu0 %v1402, 16
    %v1527 = vpop.permute.xlu0 %1526
    %1530 = vrot.lane.b32.xlu0 %v1516, 24
    %v1531 = vpop.permute.xlu0 %1530
    %v1533 = vsel %vm335, %v1174, %v1523
    %v1534 = vsel %vm943, %v1533, %v1527
    %v1535 = vsel %vm945, %v1534, %v1531
    %v1536 = vpack.c.bf16 %v1535, %v1535
    %v1539 = vunpack.c.l.s4 1966171168
    %v1540 = vunpack.c.0.s8 %v1539
    %v1541 = vlaneseq
    %v1542 = vshrl.u32 %v1541, 7
    %v1543 = vsub.s32 %v1540, %v1542
    %v1544 = vrot.slane %v1536, %v1543
    %v1545 = vcombine.high %v1544, %v1544
    %v1547 = vunpack.c.l.s4 1966171168
    %v1548 = vunpack.c.0.s8 %v1547
    %v1549 = vlaneseq
    %v1550 = vshrl.u32 %v1549, 7
    %v1551 = vsub.s32 %v1548, %v1550
    %v1552 = vrot.slane %v1544, %v1551
    %v1554 = vunpack.c.l.s4 1966171168
    %v1555 = vunpack.c.0.s8 %v1554
    %v1556 = vlaneseq
    %v1557 = vshrl.u32 %v1556, 7
    %v1558 = vsub.s32 %v1555, %v1557
    %v1559 = vrot.slane %v1545, %v1558
    %v1560 = vcombine.high %v1552, %v1552
    %v1561 = vcombine.high %v1559, %v1559
    %v1562 = vunpack.i.l.s16 %v1552
    %v1563 = vunpack.i.h.s16 %v1552
    %v1564 = vunpack.i.l.s16 %v1559
    %v1565 = vunpack.i.h.s16 %v1559
    %v1566 = vunpack.i.l.s16 %v1560
    %v1567 = vunpack.i.h.s16 %v1560
    %v1568 = vunpack.i.l.s16 %v1561
    %v1569 = vunpack.i.h.s16 %v1561
    %v1570 = vpack.i.b16 %v1562, %v1562
    %v1571 = vpack.i.b16 %v1563, %v1563
    %v1572 = vpack.i.b16 %v1564, %v1564
    %v1573 = vpack.i.b16 %v1565, %v1565
    %v1574 = vpack.i.b16 %v1566, %v1566
    %v1575 = vpack.i.b16 %v1567, %v1567
    %v1576 = vpack.i.b16 %v1568, %v1568
    %v1577 = vpack.i.b16 %v1569, %v1569
    %vm1586 = vsmask.f32 7938
    %vm1587 = vmand %vm997, %vm1586
    %v1588 = vld [vmem:[%s3] sm:$0x1]
    %v1589 = vsel %vm1587, %v1570, %v1588
    %1590 = vst [vmem:[%s3] sm:$0x1] %v1589
    %v1591 = vld [vmem:[%s3 + $0x1] sm:$0x1]
    %v1592 = vsel %vm1587, %v1571, %v1591
    %1593 = vst [vmem:[%s3 + $0x1] sm:$0x1] %v1592
    %v1594 = vld [vmem:[%s3 + $0x2] sm:$0x1]
    %v1595 = vsel %vm1587, %v1572, %v1594
    %1596 = vst [vmem:[%s3 + $0x2] sm:$0x1] %v1595
    %v1597 = vld [vmem:[%s3 + $0x3] sm:$0x1]
    %v1598 = vsel %vm1587, %v1573, %v1597
    %1599 = vst [vmem:[%s3 + $0x3] sm:$0x1] %v1598
    %v1600 = vld [vmem:[%s3 + $0x4] sm:$0x1]
    %v1601 = vsel %vm1587, %v1574, %v1600
    %1602 = vst [vmem:[%s3 + $0x4] sm:$0x1] %v1601
    %v1603 = vld [vmem:[%s3 + $0x5] sm:$0x1]
    %v1604 = vsel %vm1587, %v1575, %v1603
    %1605 = vst [vmem:[%s3 + $0x5] sm:$0x1] %v1604
    %v1606 = vld [vmem:[%s3 + $0x6] sm:$0x1]
    %v1607 = vsel %vm1587, %v1576, %v1606
    %1608 = vst [vmem:[%s3 + $0x6] sm:$0x1] %v1607
    %v1609 = vld [vmem:[%s3 + $0x7] sm:$0x1]
    %v1610 = vsel %vm1587, %v1577, %v1609
    %1611 = vst [vmem:[%s3 + $0x7] sm:$0x1] %v1610
    %v1612 = vmul.f32 %v1471, 0.25
    %s1613 = scalar_lea.vmem [#allocation2], 8
    %1614 = vst.msk [vmem:[%s1613] sm:$0xff] %vm335, %v1612
    // Predicated region
    $region14: #{dp_multihead_attention_forward.8} parent=1 // pred_check
      _
    $region15: #{dp_multihead_attention_forward.8} parent=1 // pred_check_branch
      %1616 = sbr.rel (0) target = $region17
    $region16: #{dp_multihead_attention_forward.8} parent=1 // pred_region
      _
    $region17: #{dp_multihead_attention_forward.8} parent=1 // pred_fallthru
      _
    // Predicated region
    $region18: #{dp_multihead_attention_forward.8} parent=1 // pred_check
      _
    $region19: #{dp_multihead_attention_forward.8} parent=1 // pred_check_branch
      %1618 = sbr.rel (0) target = $region21
    $region20: #{dp_multihead_attention_forward.8} parent=1 // pred_region
      %s1620 = ssub.s32 256, 256
      %1621 = vsyncadd [#allocation3], %s1620
      %s1622 = sshll.u32 [#allocation2], 4
      %s1623 = int_to_ptr.vmem [resolvable:$true] %s1622
      %1628 = dma.vmem_to_hbm [thread:$0]  %s1623, 256, %s4, [#allocation3], 128, 128, 8
    $region21: #{dp_multihead_attention_forward.8} parent=1 // pred_fallthru
      _
    // Predicated region
    $region22: #{dp_multihead_attention_forward.8} parent=1 // pred_check
      _
    $region23: #{dp_multihead_attention_forward.8} parent=1 // pred_check_branch
      %1630 = sbr.rel (0) target = $region25
    $region24: #{dp_multihead_attention_forward.8} parent=1 // pred_region
      _
    $region25: #{dp_multihead_attention_forward.8} parent=1 // pred_fallthru
      _
    // Predicated region
    $region26: #{dp_multihead_attention_forward.8} parent=1 // pred_check
      _
    $region27: #{dp_multihead_attention_forward.8} parent=1 // pred_check_branch
      %1632 = sbr.rel (0) target = $region29
    $region28: #{dp_multihead_attention_forward.8} parent=1 // pred_region
      %1633 = dma.done [#allocation3], 256
    $region29: #{dp_multihead_attention_forward.8} parent=1 // pred_fallthru
      _
    %1634 = vsyncpa [#allocation3], 1

</llo_original>
